<compile_context>
chip_gen: v7x
topology: tpu7x:2x2x1
jax: 0.10.0
libtpu: 0.0.40
codegen_flags: <defaults>
</compile_context>

<pallas_src>
import functools
import math

import jax
import jax.numpy as jnp
from jax import lax
from jax.experimental import pallas as pl
from jax.experimental.pallas import tpu as pltpu


# ---------------------------------------------------------------------------
# Weight folding: absorb the channel/spatial-mixing raw reshapes, the
# 1/sqrt(HW) scale and the qkv bias into a single bf16 projection matrix.
# ---------------------------------------------------------------------------
def _fold_qkv_weights(w_qkv, b_qkv, HW, E, Kp, scale, dtype):
    # w_qkv: (3E, C), b_qkv: (3E,).  Returns (3*HW, Kp):
    #   rows [0,HW): q (pre-scaled), [HW,2HW): k, [2HW,3HW): v
    #   cols [0,Cr): weights on the (Cr,E) regroup of x, col Cr: bias, rest: 0
    C = w_qkv.shape[1]
    r = HW // E
    Cr = C * r
    i = jnp.arange(HW)
    a_range = jnp.arange(r)
    blocks = []
    for off in range(3):                      # 0: q, 1: k, 2: v
        u = 3 * i + off                       # flat E-chunk index in the (3E*HW) buffer
        c = u // r                            # source qkv output channel
        a = u % r                             # which E-chunk of that channel's row
        w_rows = w_qkv[c, :]                                             # (HW, C)
        onehot = (a[:, None] == a_range[None, :]).astype(w_qkv.dtype)    # (HW, r)
        A = (w_rows[:, :, None] * onehot[:, None, :]).reshape(HW, Cr)    # (HW, Cr)
        b = b_qkv[c][:, None]                                            # (HW, 1)
        Ab = jnp.concatenate([A, b], axis=1)                             # (HW, Cr+1)
        if off == 0:                          # fold attention scale into q weights+bias
            Ab = Ab * scale
        blocks.append(Ab)
    a_fold = jnp.concatenate(blocks, axis=0)                             # (3HW, Cr+1)
    a_fold = jnp.pad(a_fold, ((0, 0), (0, Kp - (Cr + 1))))               # (3HW, Kp)
    return a_fold.astype(dtype)


def _fold_out_weights(w_out, b_out, r, dtype):
    # out 1x1 conv folded through the second raw reshape:
    #   OUT[c*r + a, e2] = final[c, a*E + e2]  ==  kron(W_out, I_r) @ o + repeat(b_out, r)
    wk = jnp.kron(w_out, jnp.eye(r, dtype=w_out.dtype)).astype(dtype)    # (Cr, HW)
    bk = jnp.repeat(b_out, r)[:, None].astype(jnp.float32)               # (Cr, 1)
    return wk, bk


# ---------------------------------------------------------------------------
# Fused kernel: qkv projection -> j-tiled attention -> out projection.
# ---------------------------------------------------------------------------
def _fused_attention_kernel(x_ref, a_ref, wo_ref, bo_ref, out_ref, *, HW, TJ, num_jt):
    # x_ref:   (Kp, E)    bf16  per-batch regroup of x (+ ones row, + zero pad)
    # a_ref:   (3*HW, Kp) bf16  fused folded qkv weights (bias column folded in)
    # wo_ref:  (Cr, HW)   bf16  kron(W_out, I_r)
    # bo_ref:  (Cr, 1)    f32   repeated out bias
    # out_ref: (Cr, E)          per-batch output regroup of (C, HW)

    # Single fused q/k/v projection (MXU, bf16 operands, f32 accumulate).
    qkv = jnp.dot(a_ref[...], x_ref[...], preferred_element_type=jnp.float32)  # (3HW, E)
    q = qkv[0:HW].astype(jnp.bfloat16)          # 1/sqrt(HW) already folded into q rows
    k = qkv[HW:2 * HW].astype(jnp.bfloat16)
    v = qkv[2 * HW:3 * HW].astype(jnp.bfloat16)

    # Attention, tiled over the j (column) axis.  softmax(dim=-2) reduces over
    # i, which is fully resident, so each j-tile's softmax is exact and o just
    # accumulates over tiles.  At the demo shapes num_jt == 1 (no overhead).
    o = None
    for t in range(num_jt):                     # static unroll
        kt = k[t * TJ:(t + 1) * TJ]             # (TJ, E)
        vt = v[t * TJ:(t + 1) * TJ]             # (TJ, E)
        s = lax.dot_general(q, kt, (((1,), (1,)), ((), ())),
                            preferred_element_type=jnp.float32)          # (HW, TJ) f32
        # f32 softmax (v5e-safe); axis-0 (sublane) reductions stay on the VPU.
        m = jnp.max(s, axis=0, keepdims=True)                            # (1, TJ)
        ex = jnp.exp(s - m)                                              # (HW, TJ)
        denom = jnp.sum(ex, axis=0, keepdims=True)                       # (1, TJ)
        # One fused expression: EUP approx reciprocal, VPU mul, cast to bf16.
        p = (ex * pl.reciprocal(denom, approx=True)).astype(jnp.bfloat16)
        ot = jnp.dot(p, vt, preferred_element_type=jnp.float32)          # (HW, E)
        o = ot if o is None else o + ot

    # Out 1x1 conv with the second raw reshape folded into the (bf16) weight.
    out = jnp.dot(wo_ref[...], o.astype(jnp.bfloat16),
                  preferred_element_type=jnp.float32) + bo_ref[...]
    out_ref[...] = out.astype(out_ref.dtype)


# ---------------------------------------------------------------------------
# Full forward (mirrors the PyTorch module's semantics exactly)
# ---------------------------------------------------------------------------
def attention_forward(x, w_qkv, b_qkv, w_out, b_out, embed_dim):
    N, C, H, W = x.shape
    HW = H * W
    E = embed_dim
    assert w_qkv.shape == (3 * E, C) and w_out.shape == (C, E)
    # TODO(synk): HW % embed_dim != 0 would need an in-kernel relayout / unfused fallback.
    assert HW % E == 0, "fused kernel requires H*W % embed_dim == 0"
    r = HW // E
    Cr = C * r
    Kp = ((Cr + 1 + 7) // 8) * 8              # pad contraction dim to a sublane multiple
    scale = 1.0 / math.sqrt(HW)

    a_f = _fold_qkv_weights(w_qkv, b_qkv, HW, E, Kp, scale, jnp.bfloat16)   # (3HW, Kp)
    w_o, b_o = _fold_out_weights(w_out, b_out, r, jnp.bfloat16)             # (Cr,HW),(Cr,1)

    # Free row-major regroup (N,C,H,W) -> (N,Cr,E), plus a ones row (bias) and
    # zero padding rows up to Kp, stored in bf16.
    x2 = x.reshape(N, Cr, E)
    x2a = jnp.concatenate(
        [x2, jnp.ones((N, 1, E), x.dtype), jnp.zeros((N, Kp - Cr - 1, E), x.dtype)],
        axis=1).astype(jnp.bfloat16)                                        # (N, Kp, E)

    # j-tile size for the scores: full HW when it fits, else a divisor <= 512.
    TJ = HW
    if HW > 512:
        for cand in (512, 384, 256, 128):
            if HW % cand == 0:
                TJ = cand
                break
    num_jt = HW // TJ

    kernel = functools.partial(_fused_attention_kernel, HW=HW, TJ=TJ, num_jt=num_jt)

    flops = N * (2 * (3 * HW) * Kp * E        # fused qkv projection
                 + 2 * HW * HW * E            # q k^T
                 + 2 * HW * HW * E            # p v
                 + 2 * Cr * HW * E)           # folded out projection
    transcendentals = N * (HW * HW + HW)      # exp + reciprocal
    bytes_accessed = (N * Kp * E * 2          # x (bf16)
                      + 3 * HW * Kp * 2       # folded qkv weights (bf16)
                      + Cr * HW * 2 + Cr * 4  # folded out weights / bias
                      + N * Cr * E * 4)       # output (f32)
    cost = pl.CostEstimate(flops=flops, transcendentals=transcendentals,
                           bytes_accessed=bytes_accessed)

    # VMEM budget: resident weights + double-buffered per-batch blocks +
    # in-kernel temporaries (qkv, j-tile scores/softmax, o), with headroom.
    w_bytes = 3 * HW * Kp * 2 + Cr * HW * 2 + Cr * 128 * 4
    io_bytes = 2 * (Kp * E * 2 + Cr * E * 4)
    tmp_bytes = 3 * HW * E * (4 + 2) + 3 * HW * TJ * 4 + HW * TJ * 2 + 2 * HW * E * 4
    vmem_limit = int(min(max(2 * (w_bytes + io_bytes + tmp_bytes), 8 << 20), 32 << 20))

    const_w = dict(pipeline_mode=pl.Buffered(buffer_count=1))   # constant across grid

    out3 = pl.pallas_call(
        kernel,
        out_shape=jax.ShapeDtypeStruct((N, Cr, E), x.dtype),
        grid=(N,),
        in_specs=[
            pl.BlockSpec((pl.Squeezed(), Kp, E), lambda n: (n, 0, 0)),
            pl.BlockSpec((3 * HW, Kp), lambda n: (0, 0), **const_w),
            pl.BlockSpec((Cr, HW), lambda n: (0, 0), **const_w),
            pl.BlockSpec((Cr, 1), lambda n: (0, 0), **const_w),
        ],
        out_specs=pl.BlockSpec((pl.Squeezed(), Cr, E), lambda n: (n, 0, 0)),
        compiler_params=pltpu.CompilerParams(
            dimension_semantics=("parallel",),      # N>=2 feeds both v7x TensorCores
            vmem_limit_bytes=vmem_limit),
        cost_estimate=cost,
    )(x2a, a_f, w_o, b_o)

    # Free row-major regroup back: (N, C*r, E) == (N, C, HW) == (N, C, H, W)
    return out3.reshape(N, C, H, W)


# ---------------------------------------------------------------------------
# Pure-JAX reference (faithful transcription of the torch module, all f32)
# ---------------------------------------------------------------------------
def reference_forward(x, w_qkv, b_qkv, w_out, b_out, embed_dim):
    N, C, H, W = x.shape
    HW = H * W
    E = embed_dim
    qkv = jnp.einsum("oc,nchw->nohw", w_qkv, x) + b_qkv[None, :, None, None]
    rsh = qkv.reshape(N, HW, 3 * E)
    q, k, v = rsh[..., :E], rsh[..., E:2 * E], rsh[..., 2 * E:]
    s = jnp.einsum("nie,nje->nij", q, k) / math.sqrt(HW)
    p = jax.nn.softmax(s, axis=-2)
    o = jnp.einsum("nij,nje->nie", p, v).reshape(N, E, H, W)
    return jnp.einsum("oe,nehw->nohw", w_out, o) + b_out[None, :, None, None]


if __name__ == "__main__":
    N, C, H, W = 2, 4, 16, 16
    E = 32  # embed_dim

    key = jax.random.PRNGKey(0)
    kx, k1, k2, k3, k4 = jax.random.split(key, 5)

    x = jax.random.normal(kx, (N, C, H, W), dtype=jnp.float32)
    w_qkv = jax.random.normal(k1, (3 * E, C), dtype=jnp.float32) * 0.1
    b_qkv = jax.random.normal(k2, (3 * E,), dtype=jnp.float32) * 0.1
    w_out = jax.random.normal(k3, (C, E), dtype=jnp.float32) * 0.1
    b_out = jax.random.normal(k4, (C,), dtype=jnp.float32) * 0.1

    fwd = jax.jit(attention_forward, static_argnames="embed_dim")
    out = jax.block_until_ready(fwd(x, w_qkv, b_qkv, w_out, b_out, embed_dim=E))

    ref = reference_forward(x, w_qkv, b_qkv, w_out, b_out, E)
    assert out.shape == (N, C, H, W)
    # Tolerance covers bf16 operands on input/weights/scores/p-v/out-proj
    # (f32 accumulation throughout) plus the approx EUP reciprocal.
    err = float(jnp.max(jnp.abs(out - ref)))
    assert jnp.allclose(out, ref, atol=1e-2, rtol=1e-2), (
        "mismatch vs reference: max abs err = " + str(err))

    print("KERNEL_OK")
</pallas_src>

<mosaic_0001>
module attributes {stable_mosaic.version = 11 : i64} {
  func.func @_fused_attention_kernel(%arg0: i32, %arg1: memref<1x40x32xbf16, #tpu.memory_space<vmem>>, %arg2: memref<768x40xbf16, #tpu.memory_space<vmem>>, %arg3: memref<32x256xbf16, #tpu.memory_space<vmem>>, %arg4: memref<32x1xf32, #tpu.memory_space<vmem>>, %arg5: memref<1x32x32xf32, #tpu.memory_space<vmem>>) attributes {dimension_semantics = [#tpu.dimension_semantics<parallel>], iteration_bounds = array<i64: 2>, scalar_prefetch = 0 : i64, scratch_operands = 0 : i64, tpu.core_type = #tpu.core_type<tc>, window_params = [{transform_indices = @transform_0, window_bounds = array<i64: 1, 40, 32>}, {pipeline_mode = #tpu.pipeline_mode<synchronous>, transform_indices = @transform_1, window_bounds = array<i64: 768, 40>}, {pipeline_mode = #tpu.pipeline_mode<synchronous>, transform_indices = @transform_2, window_bounds = array<i64: 32, 256>}, {pipeline_mode = #tpu.pipeline_mode<synchronous>, transform_indices = @transform_3, window_bounds = array<i64: 32, 1>}, {transform_indices = @transform_4, window_bounds = array<i64: 1, 32, 32>}]} {
    %c0 = arith.constant 0 : index
    %c0_0 = arith.constant 0 : index
    %0 = vector.load %arg2[%c0, %c0_0] : memref<768x40xbf16, #tpu.memory_space<vmem>>, vector<768x40xbf16>
    %c0_1 = arith.constant 0 : index
    %c0_2 = arith.constant 0 : index
    %c0_3 = arith.constant 0 : index
    %1 = vector.load %arg1[%c0_1, %c0_2, %c0_3] : memref<1x40x32xbf16, #tpu.memory_space<vmem>>, vector<1x40x32xbf16>
    %2 = vector.shape_cast %1 : vector<1x40x32xbf16> to vector<40x32xbf16>
    %cst = arith.constant dense<0.000000e+00> : vector<768x32xf32>
    %3 = tpu.matmul %0, %2, %cst {dimension_numbers = #tpu.dot_dimension_numbers<[1], [0], [0], [1], [0, 0, 1, 1], [], []>} : vector<768x40xbf16>, vector<40x32xbf16>, vector<768x32xf32> -> vector<768x32xf32>
    %4 = vector.extract_strided_slice %3 {offsets = [0, 0], sizes = [256, 32], strides = [1, 1]} : vector<768x32xf32> to vector<256x32xf32>
    %5 = arith.truncf %4 : vector<256x32xf32> to vector<256x32xbf16>
    %6 = vector.extract_strided_slice %3 {offsets = [256, 0], sizes = [256, 32], strides = [1, 1]} : vector<768x32xf32> to vector<256x32xf32>
    %7 = arith.truncf %6 : vector<256x32xf32> to vector<256x32xbf16>
    %8 = vector.extract_strided_slice %3 {offsets = [512, 0], sizes = [256, 32], strides = [1, 1]} : vector<768x32xf32> to vector<256x32xf32>
    %9 = arith.truncf %8 : vector<256x32xf32> to vector<256x32xbf16>
    %cst_4 = arith.constant dense<0.000000e+00> : vector<256x256xf32>
    %10 = tpu.matmul %5, %7, %cst_4 {dimension_numbers = #tpu.dot_dimension_numbers<[1], [1], [0], [0], [0, 0, 1, 0], [], []>} : vector<256x32xbf16>, vector<256x32xbf16>, vector<256x256xf32> -> vector<256x256xf32>
    %cst_5 = arith.constant dense<0xFF800000> : vector<256xf32>
    %11 = vector.multi_reduction <maximumf>, %10, %cst_5 [0] : vector<256x256xf32> to vector<256xf32>
    %12 = vector.shape_cast %11 : vector<256xf32> to vector<1x256xf32>
    %13 = vector.broadcast %12 : vector<1x256xf32> to vector<256x256xf32>
    %14 = arith.subf %10, %13 : vector<256x256xf32>
    %15 = math.exp %14 : vector<256x256xf32>
    %cst_6 = arith.constant dense<0.000000e+00> : vector<256xf32>
    %16 = vector.multi_reduction <add>, %15, %cst_6 [0] : vector<256x256xf32> to vector<256xf32>
    %17 = vector.shape_cast %16 : vector<256xf32> to vector<1x256xf32>
    %18 = tpu.reciprocal %17 {approx = true} : vector<1x256xf32> -> vector<1x256xf32>
    %19 = vector.broadcast %18 : vector<1x256xf32> to vector<256x256xf32>
    %20 = arith.mulf %15, %19 : vector<256x256xf32>
    %21 = arith.truncf %20 : vector<256x256xf32> to vector<256x256xbf16>
    %cst_7 = arith.constant dense<0.000000e+00> : vector<256x32xf32>
    %22 = tpu.matmul %21, %9, %cst_7 {dimension_numbers = #tpu.dot_dimension_numbers<[1], [0], [0], [1], [0, 0, 1, 1], [], []>} : vector<256x256xbf16>, vector<256x32xbf16>, vector<256x32xf32> -> vector<256x32xf32>
    %c0_8 = arith.constant 0 : index
    %c0_9 = arith.constant 0 : index
    %23 = vector.load %arg3[%c0_8, %c0_9] : memref<32x256xbf16, #tpu.memory_space<vmem>>, vector<32x256xbf16>
    %24 = arith.truncf %22 : vector<256x32xf32> to vector<256x32xbf16>
    %cst_10 = arith.constant dense<0.000000e+00> : vector<32x32xf32>
    %25 = tpu.matmul %23, %24, %cst_10 {dimension_numbers = #tpu.dot_dimension_numbers<[1], [0], [0], [1], [0, 0, 1, 1], [], []>} : vector<32x256xbf16>, vector<256x32xbf16>, vector<32x32xf32> -> vector<32x32xf32>
    %c0_11 = arith.constant 0 : index
    %c0_12 = arith.constant 0 : index
    %26 = vector.load %arg4[%c0_11, %c0_12] : memref<32x1xf32, #tpu.memory_space<vmem>>, vector<32x1xf32>
    %27 = vector.broadcast %26 : vector<32x1xf32> to vector<32x32xf32>
    %28 = arith.addf %25, %27 : vector<32x32xf32>
    %c0_13 = arith.constant 0 : index
    %c0_14 = arith.constant 0 : index
    %c0_15 = arith.constant 0 : index
    %29 = vector.load %arg5[%c0_13, %c0_14, %c0_15] : memref<1x32x32xf32, #tpu.memory_space<vmem>>, vector<1x32x32xf32>
    %30 = vector.shape_cast %29 : vector<1x32x32xf32> to vector<32x32xf32>
    %31 = vector.shape_cast %28 : vector<32x32xf32> to vector<1x32x32xf32>
    tpu.vector_store %arg5[%c0_13, %c0_14, %c0_15], %31 {strides = array<i32>} : memref<1x32x32xf32, #tpu.memory_space<vmem>>, vector<1x32x32xf32>,
    return
  }
  func.func @transform_0(%arg0: i32) -> (i32, i32, i32) {
    %c0_i32 = arith.constant 0 : i32
    %c0_i32_0 = arith.constant 0 : i32
    %c0_i32_1 = arith.constant 0 : i32
    return %arg0, %c0_i32, %c0_i32_0 : i32, i32, i32
  }
  func.func @transform_1(%arg0: i32) -> (i32, i32) {
    %c0_i32 = arith.constant 0 : i32
    %c0_i32_0 = arith.constant 0 : i32
    %c0_i32_1 = arith.constant 0 : i32
    return %c0_i32, %c0_i32_0 : i32, i32
  }
  func.func @transform_2(%arg0: i32) -> (i32, i32) {
    %c0_i32 = arith.constant 0 : i32
    %c0_i32_0 = arith.constant 0 : i32
    %c0_i32_1 = arith.constant 0 : i32
    return %c0_i32, %c0_i32_0 : i32, i32
  }
  func.func @transform_3(%arg0: i32) -> (i32, i32) {
    %c0_i32 = arith.constant 0 : i32
    %c0_i32_0 = arith.constant 0 : i32
    %c0_i32_1 = arith.constant 0 : i32
    return %c0_i32, %c0_i32_0 : i32, i32
  }
  func.func @transform_4(%arg0: i32) -> (i32, i32, i32) {
    %c0_i32 = arith.constant 0 : i32
    %c0_i32_0 = arith.constant 0 : i32
    %c0_i32_1 = arith.constant 0 : i32
    return %arg0, %c0_i32, %c0_i32_0 : i32, i32, i32
  }
}

</mosaic_0001>

<llo_original>
// kernel: attention_forward.1
$region0: #{attention_forward.1}
  #allocation0 [shape = 'u32[]', space=smem, size = 0x4, offset = 0x4, fixed_abs, tag = 'smem constant byte address 0x4 - core index']
  #allocation1 [shape = 'u32[144,128]{1,0:T(1,128)}', space=vmem, size = 0x12000, scoped, tag = 'internal scratch']
  %s0 = inlined_call_operand.vmem [shape: bf16[2,40,32], index: 0, kind: input, shape index: {}]
  %s1 = inlined_call_operand.vmem [shape: bf16[768,40], index: 1, kind: input, shape index: {}]
  %s2 = inlined_call_operand.vmem [shape: bf16[32,256], index: 2, kind: input, shape index: {}]
  %s3 = inlined_call_operand.vmem [shape: f32[32,1], index: 3, kind: input, shape index: {}]
  %s4 = inlined_call_operand.vmem [shape: f32[2,32,32], index: 4, kind: output, shape index: {}]
  %s5 = sld [smem:[#allocation0]]
  $region49: #{attention_forward.1} parent=0
    _
  %s7 = ssub.s32 1, %s5
  %s8 = scalar_select 0, %s7, %s5
  loop: start=0, step=1, limit=4
  $region2: #{attention_forward.1} parent=0 // loop_pre_header
    _
  $region3: #{attention_forward.1} parent=0 // loop_header
    %s10 = sphi 0, %s14
    %p11 = scmp.ge.s32.totalorder %s10, 4
    %s20 = sphi 0, %s22
    %s23 = sphi 0, %s20
    %s24 = sphi 0, %s23
    %s40 = sphi 0, %s24
    %s44 = sphi 0, %s44
    %s46 = sphi 0, %s44
    %s47 = sphi 0, %s46
    %s61 = sphi 0, %s47
    %s65 = sphi 0, %s65
    %s67 = sphi 0, %s65
    %s68 = sphi 0, %s67
    %s82 = sphi 0, %s68
    %s86 = sphi 0, %s86
    %s88 = sphi 0, %s86
    %s89 = sphi 0, %s88
    %s103 = sphi 0, %s89
    %s109 = sphi 0, %s111
    %s112 = sphi 0, %s109
    %s113 = sphi 0, %s112
    %s129 = sphi 0, %s113
  $region4: #{attention_forward.1} parent=0 // loop_header_branch
    %13 = sbr.rel (%p11) target = $region8
  $region5: #{attention_forward.1} parent=0 // loop_body
    %s15 = ssub.s32 %s10, 1
    %s16 = ssub.s32 %s10, 2
    %s17 = sadd.s32 %s10, 1
    %s18 = ssub.s32 %s10, %s17
    %p19 = scmp.eq.s32.totalorder %s18, 0
    %s21 = sadd.s32 %s20, 1
    %s22 = scalar_select %p19, %s20, %s21
    %p25 = pneg %p19
    %p26 = scmp.eq.s32.totalorder %s10, 1
    %p27 = por %p25, %p26
    %p28 = scmp.ne.s32.totalorder %s20, %s23
    %p29 = scmp.eq.s32.totalorder %s10, 0
    %p30 = por %p28, %p29
    %p31 = scmp.ne.s32.totalorder %s20, %s23
    %p32 = scmp.eq.s32.totalorder %s15, 1
    %p33 = por %p31, %p32
    %p34 = scmp.ne.s32.totalorder %s23, %s24
    %p35 = scmp.eq.s32.totalorder %s15, 0
    %p36 = por %p34, %p35
    %p37 = scmp.ne.s32.totalorder %s23, %s24
    %p38 = scmp.eq.s32.totalorder %s16, 1
    %p39 = por %p37, %p38
    %p41 = scmp.ne.s32.totalorder %s24, %s40
    %p42 = scmp.eq.s32.totalorder %s16, 0
    %p43 = por %p41, %p42
    %s45 = sadd.s32 %s44, 1
    %p48 = scmp.eq.s32.totalorder %s10, 1
    %p49 = scmp.ne.s32.totalorder %s44, %s46
    %p50 = scmp.eq.s32.totalorder %s10, 0
    %p51 = por %p49, %p50
    %p52 = scmp.ne.s32.totalorder %s44, %s46
    %p53 = scmp.eq.s32.totalorder %s15, 1
    %p54 = por %p52, %p53
    %p55 = scmp.ne.s32.totalorder %s46, %s47
    %p56 = scmp.eq.s32.totalorder %s15, 0
    %p57 = por %p55, %p56
    %p58 = scmp.ne.s32.totalorder %s46, %s47
    %p59 = scmp.eq.s32.totalorder %s16, 1
    %p60 = por %p58, %p59
    %p62 = scmp.ne.s32.totalorder %s47, %s61
    %p63 = scmp.eq.s32.totalorder %s16, 0
    %p64 = por %p62, %p63
    %s66 = sadd.s32 %s65, 1
    %p69 = scmp.eq.s32.totalorder %s10, 1
    %p70 = scmp.ne.s32.totalorder %s65, %s67
    %p71 = scmp.eq.s32.totalorder %s10, 0
    %p72 = por %p70, %p71
    %p73 = scmp.ne.s32.totalorder %s65, %s67
    %p74 = scmp.eq.s32.totalorder %s15, 1
    %p75 = por %p73, %p74
    %p76 = scmp.ne.s32.totalorder %s67, %s68
    %p77 = scmp.eq.s32.totalorder %s15, 0
    %p78 = por %p76, %p77
    %p79 = scmp.ne.s32.totalorder %s67, %s68
    %p80 = scmp.eq.s32.totalorder %s16, 1
    %p81 = por %p79, %p80
    %p83 = scmp.ne.s32.totalorder %s68, %s82
    %p84 = scmp.eq.s32.totalorder %s16, 0
    %p85 = por %p83, %p84
    %s87 = sadd.s32 %s86, 1
    %p90 = scmp.eq.s32.totalorder %s10, 1
    %p91 = scmp.ne.s32.totalorder %s86, %s88
    %p92 = scmp.eq.s32.totalorder %s10, 0
    %p93 = por %p91, %p92
    %p94 = scmp.ne.s32.totalorder %s86, %s88
    %p95 = scmp.eq.s32.totalorder %s15, 1
    %p96 = por %p94, %p95
    %p97 = scmp.ne.s32.totalorder %s88, %s89
    %p98 = scmp.eq.s32.totalorder %s15, 0
    %p99 = por %p97, %p98
    %p100 = scmp.ne.s32.totalorder %s88, %s89
    %p101 = scmp.eq.s32.totalorder %s16, 1
    %p102 = por %p100, %p101
    %p104 = scmp.ne.s32.totalorder %s89, %s103
    %p105 = scmp.eq.s32.totalorder %s16, 0
    %p106 = por %p104, %p105
    %s107 = ssub.s32 %s10, %s17
    %p108 = scmp.eq.s32.totalorder %s107, 0
    %s110 = sadd.s32 %s109, 1
    %s111 = scalar_select %p108, %s109, %s110
    %p114 = pneg %p108
    %p115 = scmp.eq.s32.totalorder %s10, 1
    %p116 = por %p114, %p115
    %p117 = scmp.ne.s32.totalorder %s109, %s112
    %p118 = scmp.eq.s32.totalorder %s10, 0
    %p119 = por %p117, %p118
    %p120 = scmp.ne.s32.totalorder %s109, %s112
    %p121 = scmp.eq.s32.totalorder %s15, 1
    %p122 = por %p120, %p121
    %p123 = scmp.ne.s32.totalorder %s112, %s113
    %p124 = scmp.eq.s32.totalorder %s15, 0
    %p125 = por %p123, %p124
    %p126 = scmp.ne.s32.totalorder %s112, %s113
    %p127 = scmp.eq.s32.totalorder %s16, 1
    %p128 = por %p126, %p127
    %p130 = scmp.ne.s32.totalorder %s113, %s129
    %p131 = scmp.eq.s32.totalorder %s16, 0
    %p132 = por %p130, %p131
    %p133 = scmp.le.s32.totalorder 1, %s10
    %p134 = scmp.lt.s32.totalorder %s10, 3
    %p135 = pnand %p133, %p134
    %p136 = pneg %p135
    // Predicated region
    $region9: #{attention_forward.1} parent=5 // pred_check
      _
    $region10: #{attention_forward.1} parent=5 // pred_check_branch
      %138 = sbr.rel (%p135) target = $region12
    $region11: #{attention_forward.1} parent=5 // pred_region
      %s139 = ssub.s32 %s10, 1
      // Predicated region
      $region13: #{attention_forward.1} parent=11 // pred_check
        %p140 = pneg %p57
      $region14: #{attention_forward.1} parent=11 // pred_check_branch
        %142 = sbr.rel (%p140) target = $region16
      $region15: #{attention_forward.1} parent=11 // pred_region
        _
      $region16: #{attention_forward.1} parent=11 // pred_fallthru
        _
      // Predicated region
      $region17: #{attention_forward.1} parent=11 // pred_check
        %p143 = pneg %p78
      $region18: #{attention_forward.1} parent=11 // pred_check_branch
        %145 = sbr.rel (%p143) target = $region20
      $region19: #{attention_forward.1} parent=11 // pred_region
        _
      $region20: #{attention_forward.1} parent=11 // pred_fallthru
        _
      // Predicated region
      $region21: #{attention_forward.1} parent=11 // pred_check
        %p146 = pneg %p99
      $region22: #{attention_forward.1} parent=11 // pred_check_branch
        %148 = sbr.rel (%p146) target = $region24
      $region23: #{attention_forward.1} parent=11 // pred_region
        _
      $region24: #{attention_forward.1} parent=11 // pred_fallthru
        _
    $region12: #{attention_forward.1} parent=5 // pred_fallthru
      _
    %p149 = scmp.lt.s32.totalorder %s10, 2
    // Predicated region
    $region25: #{attention_forward.1} parent=5 // pred_check
      %p150 = pneg %p149
    $region26: #{attention_forward.1} parent=5 // pred_check_branch
      %152 = sbr.rel (%p150) target = $region28
    $region27: #{attention_forward.1} parent=5 // pred_region
      // Predicated region
      $region29: #{attention_forward.1} parent=27 // pred_check
        %p153 = pneg %p30
      $region30: #{attention_forward.1} parent=27 // pred_check_branch
        %155 = sbr.rel (%p153) target = $region32
      $region31: #{attention_forward.1} parent=27 // pred_region
        %p156 = scmp.lt.s32.totalorder %s10, 1
        %s157 = scalar_select %p156, %s10, 1
        %s158 = smul.addr %s157, 5
        %s159 = smul.addr %s158, 4
        %s160 = scalar_lea.vmem %s0, %s159
      $region32: #{attention_forward.1} parent=27 // pred_fallthru
        _
    $region28: #{attention_forward.1} parent=5 // pred_fallthru
      _
    %p161 = scmp.le.s32.totalorder 1, %s10
    %p162 = scmp.lt.s32.totalorder %s10, 3
    %p163 = pnand %p161, %p162
    %p164 = pneg %p163
    // Predicated region
    $region33: #{attention_forward.1} parent=5 // pred_check
      _
    $region34: #{attention_forward.1} parent=5 // pred_check_branch
      %166 = sbr.rel (%p163) target = $region36
    $region35: #{attention_forward.1} parent=5 // pred_region
      %s167 = ssub.s32 %s10, 1
      %p168 = scmp.lt.s32.totalorder %s15, 1
      %s169 = scalar_select %p168, %s15, 1
      %s170 = smul.addr %s169, 5
      %s171 = smul.addr %s170, 4
      %s172 = scalar_lea.vmem %s0, %s171
      %p173 = pneg %p36
      %p174 = pneg %p33
      %p175 = pneg %p57
      %p176 = pneg %p54
      %p177 = pneg %p78
      %p178 = pneg %p75
      %p179 = pneg %p99
      %p180 = pneg %p96
      %p181 = pneg %p125
      %p182 = pneg %p122
      %p183 = scmp.lt.s32.totalorder %s15, 1
      %s184 = scalar_select %p183, %s15, 1
      %s185 = smul.addr %s184, 4
      %s186 = smul.addr %s185, 8
      %s187 = scalar_lea.vmem %s4, %s186
      %p188 = scmp.lt.s32.totalorder %s15, 1
      %s189 = scalar_select %p188, %s15, 1
      %s190 = smul.addr %s189, 5
      %s191 = smul.addr %s190, 4
      %s192 = scalar_lea.vmem %s0, %s191
      %p193 = scmp.lt.s32.totalorder %s15, 1
      %s194 = scalar_select %p193, %s15, 1
      %s195 = smul.addr %s194, 4
      %s196 = smul.addr %s195, 8
      %s197 = scalar_lea.vmem %s4, %s196
      %v199 = vld [vmem:[%s1] sm:$0xf]
      %v200 = vld [vmem:[%s1 + $0x4] sm:$0xf]
      %v201 = vld [vmem:[%s1 + $0x8] sm:$0xf]
      %v202 = vld [vmem:[%s1 + $0xc] sm:$0xf]
      %v203 = vld [vmem:[%s1 + $0x10] sm:$0xf]
      %v204 = vld [vmem:[%s1 + $0x14] sm:$0xf]
      %v205 = vld [vmem:[%s1 + $0x18] sm:$0xf]
      %v206 = vld [vmem:[%s1 + $0x1c] sm:$0xf]
      %v207 = vld [vmem:[%s1 + $0x20] sm:$0xf]
      %v208 = vld [vmem:[%s1 + $0x24] sm:$0xf]
      %v209 = vld [vmem:[%s1 + $0x28] sm:$0xf]
      %v210 = vld [vmem:[%s1 + $0x2c] sm:$0xf]
      %v211 = vld [vmem:[%s1 + $0x30] sm:$0xf]
      %v212 = vld [vmem:[%s1 + $0x34] sm:$0xf]
      %v213 = vld [vmem:[%s1 + $0x38] sm:$0xf]
      %v214 = vld [vmem:[%s1 + $0x3c] sm:$0xf]
      %v215 = vld [vmem:[%s1 + $0x40] sm:$0xf]
      %v216 = vld [vmem:[%s1 + $0x44] sm:$0xf]
      %v217 = vld [vmem:[%s1 + $0x48] sm:$0xf]
      %v218 = vld [vmem:[%s1 + $0x4c] sm:$0xf]
      %v219 = vld [vmem:[%s1 + $0x50] sm:$0xf]
      %v220 = vld [vmem:[%s1 + $0x54] sm:$0xf]
      %v221 = vld [vmem:[%s1 + $0x58] sm:$0xf]
      %v222 = vld [vmem:[%s1 + $0x5c] sm:$0xf]
      %v223 = vld [vmem:[%s1 + $0x60] sm:$0xf]
      %v224 = vld [vmem:[%s1 + $0x64] sm:$0xf]
      %v225 = vld [vmem:[%s1 + $0x68] sm:$0xf]
      %v226 = vld [vmem:[%s1 + $0x6c] sm:$0xf]
      %v227 = vld [vmem:[%s1 + $0x70] sm:$0xf]
      %v228 = vld [vmem:[%s1 + $0x74] sm:$0xf]
      %v229 = vld [vmem:[%s1 + $0x78] sm:$0xf]
      %v230 = vld [vmem:[%s1 + $0x7c] sm:$0xf]
      %v231 = vld [vmem:[%s1 + $0x80] sm:$0xf]
      %v232 = vld [vmem:[%s1 + $0x84] sm:$0xf]
      %v233 = vld [vmem:[%s1 + $0x88] sm:$0xf]
      %v234 = vld [vmem:[%s1 + $0x8c] sm:$0xf]
      %v235 = vld [vmem:[%s1 + $0x90] sm:$0xf]
      %v236 = vld [vmem:[%s1 + $0x94] sm:$0xf]
      %v237 = vld [vmem:[%s1 + $0x98] sm:$0xf]
      %v238 = vld [vmem:[%s1 + $0x9c] sm:$0xf]
      %v239 = vld [vmem:[%s1 + $0xa0] sm:$0xf]
      %v240 = vld [vmem:[%s1 + $0xa4] sm:$0xf]
      %v241 = vld [vmem:[%s1 + $0xa8] sm:$0xf]
      %v242 = vld [vmem:[%s1 + $0xac] sm:$0xf]
      %v243 = vld [vmem:[%s1 + $0xb0] sm:$0xf]
      %v244 = vld [vmem:[%s1 + $0xb4] sm:$0xf]
      %v245 = vld [vmem:[%s1 + $0xb8] sm:$0xf]
      %v246 = vld [vmem:[%s1 + $0xbc] sm:$0xf]
      %v247 = vld [vmem:[%s1 + $0xc0] sm:$0xf]
      %v248 = vld [vmem:[%s1 + $0xc4] sm:$0xf]
      %v249 = vld [vmem:[%s1 + $0xc8] sm:$0xf]
      %v250 = vld [vmem:[%s1 + $0xcc] sm:$0xf]
      %v251 = vld [vmem:[%s1 + $0xd0] sm:$0xf]
      %v252 = vld [vmem:[%s1 + $0xd4] sm:$0xf]
      %v253 = vld [vmem:[%s1 + $0xd8] sm:$0xf]
      %v254 = vld [vmem:[%s1 + $0xdc] sm:$0xf]
      %v255 = vld [vmem:[%s1 + $0xe0] sm:$0xf]
      %v256 = vld [vmem:[%s1 + $0xe4] sm:$0xf]
      %v257 = vld [vmem:[%s1 + $0xe8] sm:$0xf]
      %v258 = vld [vmem:[%s1 + $0xec] sm:$0xf]
      %v259 = vld [vmem:[%s1 + $0xf0] sm:$0xf]
      %v260 = vld [vmem:[%s1 + $0xf4] sm:$0xf]
      %v261 = vld [vmem:[%s1 + $0xf8] sm:$0xf]
      %v262 = vld [vmem:[%s1 + $0xfc] sm:$0xf]
      %v263 = vld [vmem:[%s1 + $0x100] sm:$0xf]
      %v264 = vld [vmem:[%s1 + $0x104] sm:$0xf]
      %v265 = vld [vmem:[%s1 + $0x108] sm:$0xf]
      %v266 = vld [vmem:[%s1 + $0x10c] sm:$0xf]
      %v267 = vld [vmem:[%s1 + $0x110] sm:$0xf]
      %v268 = vld [vmem:[%s1 + $0x114] sm:$0xf]
      %v269 = vld [vmem:[%s1 + $0x118] sm:$0xf]
      %v270 = vld [vmem:[%s1 + $0x11c] sm:$0xf]
      %v271 = vld [vmem:[%s1 + $0x120] sm:$0xf]
      %v272 = vld [vmem:[%s1 + $0x124] sm:$0xf]
      %v273 = vld [vmem:[%s1 + $0x128] sm:$0xf]
      %v274 = vld [vmem:[%s1 + $0x12c] sm:$0xf]
      %v275 = vld [vmem:[%s1 + $0x130] sm:$0xf]
      %v276 = vld [vmem:[%s1 + $0x134] sm:$0xf]
      %v277 = vld [vmem:[%s1 + $0x138] sm:$0xf]
      %v278 = vld [vmem:[%s1 + $0x13c] sm:$0xf]
      %v279 = vld [vmem:[%s1 + $0x140] sm:$0xf]
      %v280 = vld [vmem:[%s1 + $0x144] sm:$0xf]
      %v281 = vld [vmem:[%s1 + $0x148] sm:$0xf]
      %v282 = vld [vmem:[%s1 + $0x14c] sm:$0xf]
      %v283 = vld [vmem:[%s1 + $0x150] sm:$0xf]
      %v284 = vld [vmem:[%s1 + $0x154] sm:$0xf]
      %v285 = vld [vmem:[%s1 + $0x158] sm:$0xf]
      %v286 = vld [vmem:[%s1 + $0x15c] sm:$0xf]
      %v287 = vld [vmem:[%s1 + $0x160] sm:$0xf]
      %v288 = vld [vmem:[%s1 + $0x164] sm:$0xf]
      %v289 = vld [vmem:[%s1 + $0x168] sm:$0xf]
      %v290 = vld [vmem:[%s1 + $0x16c] sm:$0xf]
      %v291 = vld [vmem:[%s1 + $0x170] sm:$0xf]
      %v292 = vld [vmem:[%s1 + $0x174] sm:$0xf]
      %v293 = vld [vmem:[%s1 + $0x178] sm:$0xf]
      %v294 = vld [vmem:[%s1 + $0x17c] sm:$0xf]
      %v295 = vld [vmem:[%s192] sm:$0xf]
      %v296 = vld [vmem:[%s192 + $0x4] sm:$0xf]
      %v297 = vld [vmem:[%s192 + $0x8] sm:$0xf]
      %v298 = vld [vmem:[%s192 + $0xc] sm:$0xf]
      %v299 = vld [vmem:[%s192 + $0x10] sm:$0xf]
      %v396 = vunpack.c.l.b16 %v199
      %v397 = vunpack.c.l.b16 %v200
      %v398 = vunpack.c.l.b16 %v201
      %v399 = vunpack.c.l.b16 %v202
      %v400 = vunpack.c.l.b16 %v203
      %v401 = vunpack.c.l.b16 %v204
      %v402 = vunpack.c.l.b16 %v205
      %v403 = vunpack.c.l.b16 %v206
      %v404 = vunpack.c.l.b16 %v207
      %v405 = vunpack.c.l.b16 %v208
      %v406 = vunpack.c.l.b16 %v209
      %v407 = vunpack.c.l.b16 %v210
      %v408 = vunpack.c.l.b16 %v211
      %v409 = vunpack.c.l.b16 %v212
      %v410 = vunpack.c.l.b16 %v213
      %v411 = vunpack.c.l.b16 %v214
      %v412 = vunpack.c.l.b16 %v215
      %v413 = vunpack.c.l.b16 %v216
      %v414 = vunpack.c.l.b16 %v217
      %v415 = vunpack.c.l.b16 %v218
      %v416 = vunpack.c.l.b16 %v219
      %v417 = vunpack.c.l.b16 %v220
      %v418 = vunpack.c.l.b16 %v221
      %v419 = vunpack.c.l.b16 %v222
      %v420 = vunpack.c.l.b16 %v223
      %v421 = vunpack.c.l.b16 %v224
      %v422 = vunpack.c.l.b16 %v225
      %v423 = vunpack.c.l.b16 %v226
      %v424 = vunpack.c.l.b16 %v227
      %v425 = vunpack.c.l.b16 %v228
      %v426 = vunpack.c.l.b16 %v229
      %v427 = vunpack.c.l.b16 %v230
      %v428 = vunpack.c.l.b16 %v231
      %v429 = vunpack.c.l.b16 %v232
      %v430 = vunpack.c.l.b16 %v233
      %v431 = vunpack.c.l.b16 %v234
      %v432 = vunpack.c.l.b16 %v235
      %v433 = vunpack.c.l.b16 %v236
      %v434 = vunpack.c.l.b16 %v237
      %v435 = vunpack.c.l.b16 %v238
      %v436 = vunpack.c.l.b16 %v239
      %v437 = vunpack.c.l.b16 %v240
      %v438 = vunpack.c.l.b16 %v241
      %v439 = vunpack.c.l.b16 %v242
      %v440 = vunpack.c.l.b16 %v243
      %v441 = vunpack.c.l.b16 %v244
      %v442 = vunpack.c.l.b16 %v245
      %v443 = vunpack.c.l.b16 %v246
      %v444 = vunpack.c.l.b16 %v247
      %v445 = vunpack.c.l.b16 %v248
      %v446 = vunpack.c.l.b16 %v249
      %v447 = vunpack.c.l.b16 %v250
      %v448 = vunpack.c.l.b16 %v251
      %v449 = vunpack.c.l.b16 %v252
      %v450 = vunpack.c.l.b16 %v253
      %v451 = vunpack.c.l.b16 %v254
      %v452 = vunpack.c.l.b16 %v255
      %v453 = vunpack.c.l.b16 %v256
      %v454 = vunpack.c.l.b16 %v257
      %v455 = vunpack.c.l.b16 %v258
      %v456 = vunpack.c.l.b16 %v259
      %v457 = vunpack.c.l.b16 %v260
      %v458 = vunpack.c.l.b16 %v261
      %v459 = vunpack.c.l.b16 %v262
      %v460 = vunpack.c.l.b16 %v263
      %v461 = vunpack.c.l.b16 %v264
      %v462 = vunpack.c.l.b16 %v265
      %v463 = vunpack.c.l.b16 %v266
      %v464 = vunpack.c.l.b16 %v267
      %v465 = vunpack.c.l.b16 %v268
      %v466 = vunpack.c.l.b16 %v269
      %v467 = vunpack.c.l.b16 %v270
      %v468 = vunpack.c.l.b16 %v271
      %v469 = vunpack.c.l.b16 %v272
      %v470 = vunpack.c.l.b16 %v273
      %v471 = vunpack.c.l.b16 %v274
      %v472 = vunpack.c.l.b16 %v275
      %v473 = vunpack.c.l.b16 %v276
      %v474 = vunpack.c.l.b16 %v277
      %v475 = vunpack.c.l.b16 %v278
      %v476 = vunpack.c.l.b16 %v279
      %v477 = vunpack.c.l.b16 %v280
      %v478 = vunpack.c.l.b16 %v281
      %v479 = vunpack.c.l.b16 %v282
      %v480 = vunpack.c.l.b16 %v283
      %v481 = vunpack.c.l.b16 %v284
      %v482 = vunpack.c.l.b16 %v285
      %v483 = vunpack.c.l.b16 %v286
      %v484 = vunpack.c.l.b16 %v287
      %v485 = vunpack.c.l.b16 %v288
      %v486 = vunpack.c.l.b16 %v289
      %v487 = vunpack.c.l.b16 %v290
      %v488 = vunpack.c.l.b16 %v291
      %v489 = vunpack.c.l.b16 %v292
      %v490 = vunpack.c.l.b16 %v293
      %v491 = vunpack.c.l.b16 %v294
      %v492 = vpack.c.b16 %v397, %v396
      %v493 = vpack.c.b16 %v399, %v398
      %v494 = vpack.c.b16 %v401, %v400
      %v495 = vpack.c.b16 %v403, %v402
      %v496 = vpack.c.b16 %v405, %v404
      %v497 = vpack.c.b16 %v407, %v406
      %v498 = vpack.c.b16 %v409, %v408
      %v499 = vpack.c.b16 %v411, %v410
      %v500 = vpack.c.b16 %v413, %v412
      %v501 = vpack.c.b16 %v415, %v414
      %v502 = vpack.c.b16 %v417, %v416
      %v503 = vpack.c.b16 %v419, %v418
      %v504 = vpack.c.b16 %v421, %v420
      %v505 = vpack.c.b16 %v423, %v422
      %v506 = vpack.c.b16 %v425, %v424
      %v507 = vpack.c.b16 %v427, %v426
      %v508 = vpack.c.b16 %v429, %v428
      %v509 = vpack.c.b16 %v431, %v430
      %v510 = vpack.c.b16 %v433, %v432
      %v511 = vpack.c.b16 %v435, %v434
      %v512 = vpack.c.b16 %v437, %v436
      %v513 = vpack.c.b16 %v439, %v438
      %v514 = vpack.c.b16 %v441, %v440
      %v515 = vpack.c.b16 %v443, %v442
      %v516 = vpack.c.b16 %v445, %v444
      %v517 = vpack.c.b16 %v447, %v446
      %v518 = vpack.c.b16 %v449, %v448
      %v519 = vpack.c.b16 %v451, %v450
      %v520 = vpack.c.b16 %v453, %v452
      %v521 = vpack.c.b16 %v455, %v454
      %v522 = vpack.c.b16 %v457, %v456
      %v523 = vpack.c.b16 %v459, %v458
      %v524 = vpack.c.b16 %v461, %v460
      %v525 = vpack.c.b16 %v463, %v462
      %v526 = vpack.c.b16 %v465, %v464
      %v527 = vpack.c.b16 %v467, %v466
      %v528 = vpack.c.b16 %v469, %v468
      %v529 = vpack.c.b16 %v471, %v470
      %v530 = vpack.c.b16 %v473, %v472
      %v531 = vpack.c.b16 %v475, %v474
      %v532 = vpack.c.b16 %v477, %v476
      %v533 = vpack.c.b16 %v479, %v478
      %v534 = vpack.c.b16 %v481, %v480
      %v535 = vpack.c.b16 %v483, %v482
      %v536 = vpack.c.b16 %v485, %v484
      %v537 = vpack.c.b16 %v487, %v486
      %v538 = vpack.c.b16 %v489, %v488
      %v539 = vpack.c.b16 %v491, %v490
      %v545 = vunpack.c.l.b16 %v295
      %v546 = vunpack.c.l.b16 %v296
      %v547 = vunpack.c.l.b16 %v297
      %v548 = vunpack.c.l.b16 %v298
      %v549 = vunpack.c.l.b16 %v299
      %v550 = vpack.c.b16 %v546, %v545
      %v551 = vpack.c.b16 %v548, %v547
      %v552 = vpack.c.b16 %v549, %v549
      %vm555 = vcmask 326656
      %v557 = vsel %vm555, %v492, 0
      %v560 = vsel %vm555, %v493, 0
      %v563 = vsel %vm555, %v494, 0
      %v566 = vsel %vm555, %v495, 0
      %v569 = vsel %vm555, %v496, 0
      %v572 = vsel %vm555, %v497, 0
      %v575 = vsel %vm555, %v498, 0
      %v578 = vsel %vm555, %v499, 0
      %v581 = vsel %vm555, %v500, 0
      %v584 = vsel %vm555, %v501, 0
      %v587 = vsel %vm555, %v502, 0
      %v590 = vsel %vm555, %v503, 0
      %v593 = vsel %vm555, %v504, 0
      %v596 = vsel %vm555, %v505, 0
      %v599 = vsel %vm555, %v506, 0
      %v602 = vsel %vm555, %v507, 0
      %v605 = vsel %vm555, %v508, 0
      %v608 = vsel %vm555, %v509, 0
      %v611 = vsel %vm555, %v510, 0
      %v614 = vsel %vm555, %v511, 0
      %v617 = vsel %vm555, %v512, 0
      %v620 = vsel %vm555, %v513, 0
      %v623 = vsel %vm555, %v514, 0
      %v626 = vsel %vm555, %v515, 0
      %v629 = vsel %vm555, %v516, 0
      %v632 = vsel %vm555, %v517, 0
      %v635 = vsel %vm555, %v518, 0
      %v638 = vsel %vm555, %v519, 0
      %v641 = vsel %vm555, %v520, 0
      %v644 = vsel %vm555, %v521, 0
      %v647 = vsel %vm555, %v522, 0
      %v650 = vsel %vm555, %v523, 0
      %v653 = vsel %vm555, %v524, 0
      %v656 = vsel %vm555, %v525, 0
      %v659 = vsel %vm555, %v526, 0
      %v662 = vsel %vm555, %v527, 0
      %v665 = vsel %vm555, %v528, 0
      %v668 = vsel %vm555, %v529, 0
      %v671 = vsel %vm555, %v530, 0
      %v674 = vsel %vm555, %v531, 0
      %v677 = vsel %vm555, %v532, 0
      %v680 = vsel %vm555, %v533, 0
      %v683 = vsel %vm555, %v534, 0
      %v686 = vsel %vm555, %v535, 0
      %v689 = vsel %vm555, %v536, 0
      %v692 = vsel %vm555, %v537, 0
      %v695 = vsel %vm555, %v538, 0
      %v698 = vsel %vm555, %v539, 0
      %vm700 = vcmask 1043456
      %v702 = vsel %vm700, %v552, 0
      %704 = vmatprep.subr.bf16.mxu0 0
      %705 = vmatpush1.bf16.msra.mxu0 %v550
      %706 = vmatprep.subr.bf16.mxu0 0
      %707 = vmatpush1.bf16.msra.mxu0 %v551
      %708 = vmatprep.subr.bf16.mxu0 0
      %709 = vmatpush1.bf16.msra.mxu0 %v702
      %710 = vmatprep.subr.bf16.mxu0 0
      %711 = vmatpush1.bf16.msra.mxu0 0
      %712 = vmatprep.subr.bf16.mxu0 0
      %713 = vmatpush1.bf16.msra.mxu0 0
      %714 = vmatprep.subr.bf16.mxu0 0
      %715 = vmatpush1.bf16.msra.mxu0 0
      %716 = vmatprep.subr.bf16.mxu0 0
      %717 = vmatpush1.bf16.msra.mxu0 0
      %718 = vmatprep.subr.bf16.mxu0 0
      %719 = vmatpush1.bf16.msra.mxu0 0
      %720 = vmatprep.subr.bf16.mxu0 0
      %721 = vmatpush1.bf16.msra.mxu0 0
      %722 = vmatprep.subr.bf16.mxu0 0
      %723 = vmatpush1.bf16.msra.mxu0 0
      %724 = vmatprep.subr.bf16.mxu0 0
      %725 = vmatpush1.bf16.msra.mxu0 0
      %726 = vmatprep.subr.bf16.mxu0 0
      %727 = vmatpush1.bf16.msra.mxu0 0
      %728 = vmatprep.subr.bf16.mxu0 0
      %729 = vmatpush1.bf16.msra.mxu0 0
      %730 = vmatprep.subr.bf16.mxu0 0
      %731 = vmatpush1.bf16.msra.mxu0 0
      %732 = vmatprep.subr.bf16.mxu0 0
      %733 = vmatpush1.bf16.msra.mxu0 0
      %734 = vmatprep.subr.bf16.mxu0 0
      %735 = vmatpush1.bf16.msra.mxu0 0
      %736 = vmatprep.mubr.bf16.mxu0 0
      %737 = vmatmul.mubr.bf16.gmra.mrb[0].mxu0 %v557
      %v738 = vpop.f32.mrb[0].mxu0
      %v739 = vadd.f32 0.0, %v738
      %v740 = vpop.f32.mrb[0].mxu0
      %v741 = vpop.f32.mrb[0].mxu0
      %v742 = vadd.f32 0.0, %v741
      %v743 = vpop.f32.mrb[0].mxu0
      %744 = vmatprep.mubr.bf16.mxu0 0
      %745 = vmatmul.mubr.bf16.gmra.mrb[0].mxu0 %v560
      %v746 = vpop.f32.mrb[0].mxu0
      %v747 = vadd.f32 0.0, %v746
      %v748 = vpop.f32.mrb[0].mxu0
      %v749 = vpop.f32.mrb[0].mxu0
      %v750 = vadd.f32 0.0, %v749
      %v751 = vpop.f32.mrb[0].mxu0
      %752 = vmatprep.mubr.bf16.mxu0 0
      %753 = vmatmul.mubr.bf16.gmra.mrb[0].mxu0 %v563
      %v754 = vpop.f32.mrb[0].mxu0
      %v755 = vadd.f32 0.0, %v754
      %v756 = vpop.f32.mrb[0].mxu0
      %v757 = vpop.f32.mrb[0].mxu0
      %v758 = vadd.f32 0.0, %v757
      %v759 = vpop.f32.mrb[0].mxu0
      %760 = vmatprep.mubr.bf16.mxu0 0
      %761 = vmatmul.mubr.bf16.gmra.mrb[0].mxu0 %v566
      %v762 = vpop.f32.mrb[0].mxu0
      %v763 = vadd.f32 0.0, %v762
      %v764 = vpop.f32.mrb[0].mxu0
      %v765 = vpop.f32.mrb[0].mxu0
      %v766 = vadd.f32 0.0, %v765
      %v767 = vpop.f32.mrb[0].mxu0
      %768 = vmatprep.mubr.bf16.mxu0 0
      %769 = vmatmul.mubr.bf16.gmra.mrb[0].mxu0 %v569
      %v770 = vpop.f32.mrb[0].mxu0
      %v771 = vadd.f32 0.0, %v770
      %v772 = vpop.f32.mrb[0].mxu0
      %v773 = vpop.f32.mrb[0].mxu0
      %v774 = vadd.f32 0.0, %v773
      %v775 = vpop.f32.mrb[0].mxu0
      %776 = vmatprep.mubr.bf16.mxu0 0
      %777 = vmatmul.mubr.bf16.gmra.mrb[0].mxu0 %v572
      %v778 = vpop.f32.mrb[0].mxu0
      %v779 = vadd.f32 0.0, %v778
      %v780 = vpop.f32.mrb[0].mxu0
      %v781 = vpop.f32.mrb[0].mxu0
      %v782 = vadd.f32 0.0, %v781
      %v783 = vpop.f32.mrb[0].mxu0
      %784 = vmatprep.mubr.bf16.mxu0 0
      %785 = vmatmul.mubr.bf16.gmra.mrb[0].mxu0 %v575
      %v786 = vpop.f32.mrb[0].mxu0
      %v787 = vadd.f32 0.0, %v786
      %v788 = vpop.f32.mrb[0].mxu0
      %v789 = vpop.f32.mrb[0].mxu0
      %v790 = vadd.f32 0.0, %v789
      %v791 = vpop.f32.mrb[0].mxu0
      %792 = vmatprep.mubr.bf16.mxu0 0
      %793 = vmatmul.mubr.bf16.gmra.mrb[0].mxu0 %v578
      %v794 = vpop.f32.mrb[0].mxu0
      %v795 = vadd.f32 0.0, %v794
      %v796 = vpop.f32.mrb[0].mxu0
      %v797 = vpop.f32.mrb[0].mxu0
      %v798 = vadd.f32 0.0, %v797
      %v799 = vpop.f32.mrb[0].mxu0
      %800 = vmatprep.mubr.bf16.mxu0 0
      %801 = vmatmul.mubr.bf16.gmra.mrb[0].mxu0 %v581
      %v802 = vpop.f32.mrb[0].mxu0
      %v803 = vadd.f32 0.0, %v802
      %v804 = vpop.f32.mrb[0].mxu0
      %v805 = vpop.f32.mrb[0].mxu0
      %v806 = vadd.f32 0.0, %v805
      %v807 = vpop.f32.mrb[0].mxu0
      %808 = vmatprep.mubr.bf16.mxu0 0
      %809 = vmatmul.mubr.bf16.gmra.mrb[0].mxu0 %v584
      %v810 = vpop.f32.mrb[0].mxu0
      %v811 = vadd.f32 0.0, %v810
      %v812 = vpop.f32.mrb[0].mxu0
      %v813 = vpop.f32.mrb[0].mxu0
      %v814 = vadd.f32 0.0, %v813
      %v815 = vpop.f32.mrb[0].mxu0
      %816 = vmatprep.mubr.bf16.mxu0 0
      %817 = vmatmul.mubr.bf16.gmra.mrb[0].mxu0 %v587
      %v818 = vpop.f32.mrb[0].mxu0
      %v819 = vadd.f32 0.0, %v818
      %v820 = vpop.f32.mrb[0].mxu0
      %v821 = vpop.f32.mrb[0].mxu0
      %v822 = vadd.f32 0.0, %v821
      %v823 = vpop.f32.mrb[0].mxu0
      %824 = vmatprep.mubr.bf16.mxu0 0
      %825 = vmatmul.mubr.bf16.gmra.mrb[0].mxu0 %v590
      %v826 = vpop.f32.mrb[0].mxu0
      %v827 = vadd.f32 0.0, %v826
      %v828 = vpop.f32.mrb[0].mxu0
      %v829 = vpop.f32.mrb[0].mxu0
      %v830 = vadd.f32 0.0, %v829
      %v831 = vpop.f32.mrb[0].mxu0
      %832 = vmatprep.mubr.bf16.mxu0 0
      %833 = vmatmul.mubr.bf16.gmra.mrb[0].mxu0 %v593
      %v834 = vpop.f32.mrb[0].mxu0
      %v835 = vadd.f32 0.0, %v834
      %v836 = vpop.f32.mrb[0].mxu0
      %v837 = vpop.f32.mrb[0].mxu0
      %v838 = vadd.f32 0.0, %v837
      %v839 = vpop.f32.mrb[0].mxu0
      %840 = vmatprep.mubr.bf16.mxu0 0
      %841 = vmatmul.mubr.bf16.gmra.mrb[0].mxu0 %v596
      %v842 = vpop.f32.mrb[0].mxu0
      %v843 = vadd.f32 0.0, %v842
      %v844 = vpop.f32.mrb[0].mxu0
      %v845 = vpop.f32.mrb[0].mxu0
      %v846 = vadd.f32 0.0, %v845
      %v847 = vpop.f32.mrb[0].mxu0
      %848 = vmatprep.mubr.bf16.mxu0 0
      %849 = vmatmul.mubr.bf16.gmra.mrb[0].mxu0 %v599
      %v850 = vpop.f32.mrb[0].mxu0
      %v851 = vadd.f32 0.0, %v850
      %v852 = vpop.f32.mrb[0].mxu0
      %v853 = vpop.f32.mrb[0].mxu0
      %v854 = vadd.f32 0.0, %v853
      %v855 = vpop.f32.mrb[0].mxu0
      %856 = vmatprep.mubr.bf16.mxu0 0
      %857 = vmatmul.mubr.bf16.gmra.mrb[0].mxu0 %v602
      %v858 = vpop.f32.mrb[0].mxu0
      %v859 = vadd.f32 0.0, %v858
      %v860 = vpop.f32.mrb[0].mxu0
      %v861 = vpop.f32.mrb[0].mxu0
      %v862 = vadd.f32 0.0, %v861
      %v863 = vpop.f32.mrb[0].mxu0
      %864 = vmatprep.mubr.bf16.mxu0 0
      %865 = vmatmul.mubr.bf16.gmra.mrb[0].mxu0 %v605
      %v866 = vpop.f32.mrb[0].mxu0
      %v867 = vadd.f32 0.0, %v866
      %v868 = vpop.f32.mrb[0].mxu0
      %v869 = vpop.f32.mrb[0].mxu0
      %v870 = vadd.f32 0.0, %v869
      %v871 = vpop.f32.mrb[0].mxu0
      %872 = vmatprep.mubr.bf16.mxu0 0
      %873 = vmatmul.mubr.bf16.gmra.mrb[0].mxu0 %v608
      %v874 = vpop.f32.mrb[0].mxu0
      %v875 = vadd.f32 0.0, %v874
      %v876 = vpop.f32.mrb[0].mxu0
      %v877 = vpop.f32.mrb[0].mxu0
      %v878 = vadd.f32 0.0, %v877
      %v879 = vpop.f32.mrb[0].mxu0
      %880 = vmatprep.mubr.bf16.mxu0 0
      %881 = vmatmul.mubr.bf16.gmra.mrb[0].mxu0 %v611
      %v882 = vpop.f32.mrb[0].mxu0
      %v883 = vadd.f32 0.0, %v882
      %v884 = vpop.f32.mrb[0].mxu0
      %v885 = vpop.f32.mrb[0].mxu0
      %v886 = vadd.f32 0.0, %v885
      %v887 = vpop.f32.mrb[0].mxu0
      %888 = vmatprep.mubr.bf16.mxu0 0
      %889 = vmatmul.mubr.bf16.gmra.mrb[0].mxu0 %v614
      %v890 = vpop.f32.mrb[0].mxu0
      %v891 = vadd.f32 0.0, %v890
      %v892 = vpop.f32.mrb[0].mxu0
      %v893 = vpop.f32.mrb[0].mxu0
      %v894 = vadd.f32 0.0, %v893
      %v895 = vpop.f32.mrb[0].mxu0
      %896 = vmatprep.mubr.bf16.mxu0 0
      %897 = vmatmul.mubr.bf16.gmra.mrb[0].mxu0 %v617
      %v898 = vpop.f32.mrb[0].mxu0
      %v899 = vadd.f32 0.0, %v898
      %v900 = vpop.f32.mrb[0].mxu0
      %v901 = vpop.f32.mrb[0].mxu0
      %v902 = vadd.f32 0.0, %v901
      %v903 = vpop.f32.mrb[0].mxu0
      %904 = vmatprep.mubr.bf16.mxu0 0
      %905 = vmatmul.mubr.bf16.gmra.mrb[0].mxu0 %v620
      %v906 = vpop.f32.mrb[0].mxu0
      %v907 = vadd.f32 0.0, %v906
      %v908 = vpop.f32.mrb[0].mxu0
      %v909 = vpop.f32.mrb[0].mxu0
      %v910 = vadd.f32 0.0, %v909
      %v911 = vpop.f32.mrb[0].mxu0
      %912 = vmatprep.mubr.bf16.mxu0 0
      %913 = vmatmul.mubr.bf16.gmra.mrb[0].mxu0 %v623
      %v914 = vpop.f32.mrb[0].mxu0
      %v915 = vadd.f32 0.0, %v914
      %v916 = vpop.f32.mrb[0].mxu0
      %v917 = vpop.f32.mrb[0].mxu0
      %v918 = vadd.f32 0.0, %v917
      %v919 = vpop.f32.mrb[0].mxu0
      %920 = vmatprep.mubr.bf16.mxu0 0
      %921 = vmatmul.mubr.bf16.gmra.mrb[0].mxu0 %v626
      %v922 = vpop.f32.mrb[0].mxu0
      %v923 = vadd.f32 0.0, %v922
      %v924 = vpop.f32.mrb[0].mxu0
      %v925 = vpop.f32.mrb[0].mxu0
      %v926 = vadd.f32 0.0, %v925
      %v927 = vpop.f32.mrb[0].mxu0
      %928 = vmatprep.mubr.bf16.mxu0 0
      %929 = vmatmul.mubr.bf16.gmra.mrb[0].mxu0 %v629
      %v930 = vpop.f32.mrb[0].mxu0
      %v931 = vadd.f32 0.0, %v930
      %v932 = vpop.f32.mrb[0].mxu0
      %v933 = vpop.f32.mrb[0].mxu0
      %v934 = vadd.f32 0.0, %v933
      %v935 = vpop.f32.mrb[0].mxu0
      %936 = vmatprep.mubr.bf16.mxu0 0
      %937 = vmatmul.mubr.bf16.gmra.mrb[0].mxu0 %v632
      %v938 = vpop.f32.mrb[0].mxu0
      %v939 = vadd.f32 0.0, %v938
      %v940 = vpop.f32.mrb[0].mxu0
      %v941 = vpop.f32.mrb[0].mxu0
      %v942 = vadd.f32 0.0, %v941
      %v943 = vpop.f32.mrb[0].mxu0
      %944 = vmatprep.mubr.bf16.mxu0 0
      %945 = vmatmul.mubr.bf16.gmra.mrb[0].mxu0 %v635
      %v946 = vpop.f32.mrb[0].mxu0
      %v947 = vadd.f32 0.0, %v946
      %v948 = vpop.f32.mrb[0].mxu0
      %v949 = vpop.f32.mrb[0].mxu0
      %v950 = vadd.f32 0.0, %v949
      %v951 = vpop.f32.mrb[0].mxu0
      %952 = vmatprep.mubr.bf16.mxu0 0
      %953 = vmatmul.mubr.bf16.gmra.mrb[0].mxu0 %v638
      %v954 = vpop.f32.mrb[0].mxu0
      %v955 = vadd.f32 0.0, %v954
      %v956 = vpop.f32.mrb[0].mxu0
      %v957 = vpop.f32.mrb[0].mxu0
      %v958 = vadd.f32 0.0, %v957
      %v959 = vpop.f32.mrb[0].mxu0
      %960 = vmatprep.mubr.bf16.mxu0 0
      %961 = vmatmul.mubr.bf16.gmra.mrb[0].mxu0 %v641
      %v962 = vpop.f32.mrb[0].mxu0
      %v963 = vadd.f32 0.0, %v962
      %v964 = vpop.f32.mrb[0].mxu0
      %v965 = vpop.f32.mrb[0].mxu0
      %v966 = vadd.f32 0.0, %v965
      %v967 = vpop.f32.mrb[0].mxu0
      %968 = vmatprep.mubr.bf16.mxu0 0
      %969 = vmatmul.mubr.bf16.gmra.mrb[0].mxu0 %v644
      %v970 = vpop.f32.mrb[0].mxu0
      %v971 = vadd.f32 0.0, %v970
      %v972 = vpop.f32.mrb[0].mxu0
      %v973 = vpop.f32.mrb[0].mxu0
      %v974 = vadd.f32 0.0, %v973
      %v975 = vpop.f32.mrb[0].mxu0
      %976 = vmatprep.mubr.bf16.mxu0 0
      %977 = vmatmul.mubr.bf16.gmra.mrb[0].mxu0 %v647
      %v978 = vpop.f32.mrb[0].mxu0
      %v979 = vadd.f32 0.0, %v978
      %v980 = vpop.f32.mrb[0].mxu0
      %v981 = vpop.f32.mrb[0].mxu0
      %v982 = vadd.f32 0.0, %v981
      %v983 = vpop.f32.mrb[0].mxu0
      %984 = vmatprep.mubr.bf16.mxu0 0
      %985 = vmatmul.mubr.bf16.gmra.mrb[0].mxu0 %v650
      %v986 = vpop.f32.mrb[0].mxu0
      %v987 = vadd.f32 0.0, %v986
      %v988 = vpop.f32.mrb[0].mxu0
      %v989 = vpop.f32.mrb[0].mxu0
      %v990 = vadd.f32 0.0, %v989
      %v991 = vpop.f32.mrb[0].mxu0
      %992 = vmatprep.mubr.bf16.mxu0 0
      %993 = vmatmul.mubr.bf16.gmra.mrb[0].mxu0 %v653
      %v994 = vpop.f32.mrb[0].mxu0
      %v995 = vadd.f32 0.0, %v994
      %v996 = vpop.f32.mrb[0].mxu0
      %v997 = vpop.f32.mrb[0].mxu0
      %v998 = vadd.f32 0.0, %v997
      %v999 = vpop.f32.mrb[0].mxu0
      %1000 = vmatprep.mubr.bf16.mxu0 0
      %1001 = vmatmul.mubr.bf16.gmra.mrb[0].mxu0 %v656
      %v1002 = vpop.f32.mrb[0].mxu0
      %v1003 = vadd.f32 0.0, %v1002
      %v1004 = vpop.f32.mrb[0].mxu0
      %v1005 = vpop.f32.mrb[0].mxu0
      %v1006 = vadd.f32 0.0, %v1005
      %v1007 = vpop.f32.mrb[0].mxu0
      %1008 = vmatprep.mubr.bf16.mxu0 0
      %1009 = vmatmul.mubr.bf16.gmra.mrb[0].mxu0 %v659
      %v1010 = vpop.f32.mrb[0].mxu0
      %v1011 = vadd.f32 0.0, %v1010
      %v1012 = vpop.f32.mrb[0].mxu0
      %v1013 = vpop.f32.mrb[0].mxu0
      %v1014 = vadd.f32 0.0, %v1013
      %v1015 = vpop.f32.mrb[0].mxu0
      %1016 = vmatprep.mubr.bf16.mxu0 0
      %1017 = vmatmul.mubr.bf16.gmra.mrb[0].mxu0 %v662
      %v1018 = vpop.f32.mrb[0].mxu0
      %v1019 = vadd.f32 0.0, %v1018
      %v1020 = vpop.f32.mrb[0].mxu0
      %v1021 = vpop.f32.mrb[0].mxu0
      %v1022 = vadd.f32 0.0, %v1021
      %v1023 = vpop.f32.mrb[0].mxu0
      %1024 = vmatprep.mubr.bf16.mxu0 0
      %1025 = vmatmul.mubr.bf16.gmra.mrb[0].mxu0 %v665
      %v1026 = vpop.f32.mrb[0].mxu0
      %v1027 = vadd.f32 0.0, %v1026
      %v1028 = vpop.f32.mrb[0].mxu0
      %v1029 = vpop.f32.mrb[0].mxu0
      %v1030 = vadd.f32 0.0, %v1029
      %v1031 = vpop.f32.mrb[0].mxu0
      %1032 = vmatprep.mubr.bf16.mxu0 0
      %1033 = vmatmul.mubr.bf16.gmra.mrb[0].mxu0 %v668
      %v1034 = vpop.f32.mrb[0].mxu0
      %v1035 = vadd.f32 0.0, %v1034
      %v1036 = vpop.f32.mrb[0].mxu0
      %v1037 = vpop.f32.mrb[0].mxu0
      %v1038 = vadd.f32 0.0, %v1037
      %v1039 = vpop.f32.mrb[0].mxu0
      %1040 = vmatprep.mubr.bf16.mxu0 0
      %1041 = vmatmul.mubr.bf16.gmra.mrb[0].mxu0 %v671
      %v1042 = vpop.f32.mrb[0].mxu0
      %v1043 = vadd.f32 0.0, %v1042
      %v1044 = vpop.f32.mrb[0].mxu0
      %v1045 = vpop.f32.mrb[0].mxu0
      %v1046 = vadd.f32 0.0, %v1045
      %v1047 = vpop.f32.mrb[0].mxu0
      %1048 = vmatprep.mubr.bf16.mxu0 0
      %1049 = vmatmul.mubr.bf16.gmra.mrb[0].mxu0 %v674
      %v1050 = vpop.f32.mrb[0].mxu0
      %v1051 = vadd.f32 0.0, %v1050
      %v1052 = vpop.f32.mrb[0].mxu0
      %v1053 = vpop.f32.mrb[0].mxu0
      %v1054 = vadd.f32 0.0, %v1053
      %v1055 = vpop.f32.mrb[0].mxu0
      %1056 = vmatprep.mubr.bf16.mxu0 0
      %1057 = vmatmul.mubr.bf16.gmra.mrb[0].mxu0 %v677
      %v1058 = vpop.f32.mrb[0].mxu0
      %v1059 = vadd.f32 0.0, %v1058
      %v1060 = vpop.f32.mrb[0].mxu0
      %v1061 = vpop.f32.mrb[0].mxu0
      %v1062 = vadd.f32 0.0, %v1061
      %v1063 = vpop.f32.mrb[0].mxu0
      %1064 = vmatprep.mubr.bf16.mxu0 0
      %1065 = vmatmul.mubr.bf16.gmra.mrb[0].mxu0 %v680
      %v1066 = vpop.f32.mrb[0].mxu0
      %v1067 = vadd.f32 0.0, %v1066
      %v1068 = vpop.f32.mrb[0].mxu0
      %v1069 = vpop.f32.mrb[0].mxu0
      %v1070 = vadd.f32 0.0, %v1069
      %v1071 = vpop.f32.mrb[0].mxu0
      %1072 = vmatprep.mubr.bf16.mxu0 0
      %1073 = vmatmul.mubr.bf16.gmra.mrb[0].mxu0 %v683
      %v1074 = vpop.f32.mrb[0].mxu0
      %v1075 = vadd.f32 0.0, %v1074
      %v1076 = vpop.f32.mrb[0].mxu0
      %v1077 = vpop.f32.mrb[0].mxu0
      %v1078 = vadd.f32 0.0, %v1077
      %v1079 = vpop.f32.mrb[0].mxu0
      %1080 = vmatprep.mubr.bf16.mxu0 0
      %1081 = vmatmul.mubr.bf16.gmra.mrb[0].mxu0 %v686
      %v1082 = vpop.f32.mrb[0].mxu0
      %v1083 = vadd.f32 0.0, %v1082
      %v1084 = vpop.f32.mrb[0].mxu0
      %v1085 = vpop.f32.mrb[0].mxu0
      %v1086 = vadd.f32 0.0, %v1085
      %v1087 = vpop.f32.mrb[0].mxu0
      %1088 = vmatprep.mubr.bf16.mxu0 0
      %1089 = vmatmul.mubr.bf16.gmra.mrb[0].mxu0 %v689
      %v1090 = vpop.f32.mrb[0].mxu0
      %v1091 = vadd.f32 0.0, %v1090
      %v1092 = vpop.f32.mrb[0].mxu0
      %v1093 = vpop.f32.mrb[0].mxu0
      %v1094 = vadd.f32 0.0, %v1093
      %v1095 = vpop.f32.mrb[0].mxu0
      %1096 = vmatprep.mubr.bf16.mxu0 0
      %1097 = vmatmul.mubr.bf16.gmra.mrb[0].mxu0 %v692
      %v1098 = vpop.f32.mrb[0].mxu0
      %v1099 = vadd.f32 0.0, %v1098
      %v1100 = vpop.f32.mrb[0].mxu0
      %v1101 = vpop.f32.mrb[0].mxu0
      %v1102 = vadd.f32 0.0, %v1101
      %v1103 = vpop.f32.mrb[0].mxu0
      %1104 = vmatprep.mubr.bf16.mxu0 0
      %1105 = vmatmul.mubr.bf16.gmra.mrb[0].mxu0 %v695
      %v1106 = vpop.f32.mrb[0].mxu0
      %v1107 = vadd.f32 0.0, %v1106
      %v1108 = vpop.f32.mrb[0].mxu0
      %v1109 = vpop.f32.mrb[0].mxu0
      %v1110 = vadd.f32 0.0, %v1109
      %v1111 = vpop.f32.mrb[0].mxu0
      %1112 = vmatprep.mubr.bf16.mxu0 0
      %1113 = vmatmul.mubr.bf16.gmra.mrb[0].mxu0 %v698
      %v1114 = vpop.f32.mrb[0].mxu0
      %v1115 = vadd.f32 0.0, %v1114
      %v1116 = vpop.f32.mrb[0].mxu0
      %v1117 = vpop.f32.mrb[0].mxu0
      %v1118 = vadd.f32 0.0, %v1117
      %v1119 = vpop.f32.mrb[0].mxu0
      %1120 = vdwg.mxu0
      %v1121 = vpack.c.bf16 %v742, %v739
      %v1122 = vpack.c.bf16 %v750, %v747
      %v1123 = vpack.c.bf16 %v758, %v755
      %v1124 = vpack.c.bf16 %v766, %v763
      %v1125 = vpack.c.bf16 %v774, %v771
      %v1126 = vpack.c.bf16 %v782, %v779
      %v1127 = vpack.c.bf16 %v790, %v787
      %v1128 = vpack.c.bf16 %v798, %v795
      %v1129 = vpack.c.bf16 %v806, %v803
      %v1130 = vpack.c.bf16 %v814, %v811
      %v1131 = vpack.c.bf16 %v822, %v819
      %v1132 = vpack.c.bf16 %v830, %v827
      %v1133 = vpack.c.bf16 %v838, %v835
      %v1134 = vpack.c.bf16 %v846, %v843
      %v1135 = vpack.c.bf16 %v854, %v851
      %v1136 = vpack.c.bf16 %v862, %v859
      %v1137 = vpack.c.bf16 %v870, %v867
      %v1138 = vpack.c.bf16 %v878, %v875
      %v1139 = vpack.c.bf16 %v886, %v883
      %v1140 = vpack.c.bf16 %v894, %v891
      %v1141 = vpack.c.bf16 %v902, %v899
      %v1142 = vpack.c.bf16 %v910, %v907
      %v1143 = vpack.c.bf16 %v918, %v915
      %v1144 = vpack.c.bf16 %v926, %v923
      %v1145 = vpack.c.bf16 %v934, %v931
      %v1146 = vpack.c.bf16 %v942, %v939
      %v1147 = vpack.c.bf16 %v950, %v947
      %v1148 = vpack.c.bf16 %v958, %v955
      %v1149 = vpack.c.bf16 %v966, %v963
      %v1150 = vpack.c.bf16 %v974, %v971
      %v1151 = vpack.c.bf16 %v982, %v979
      %v1152 = vpack.c.bf16 %v990, %v987
      %v1153 = vpack.c.bf16 %v998, %v995
      %v1154 = vpack.c.bf16 %v1006, %v1003
      %v1155 = vpack.c.bf16 %v1014, %v1011
      %v1156 = vpack.c.bf16 %v1022, %v1019
      %v1157 = vpack.c.bf16 %v1030, %v1027
      %v1158 = vpack.c.bf16 %v1038, %v1035
      %v1159 = vpack.c.bf16 %v1046, %v1043
      %v1160 = vpack.c.bf16 %v1054, %v1051
      %v1161 = vpack.c.bf16 %v1062, %v1059
      %v1162 = vpack.c.bf16 %v1070, %v1067
      %v1163 = vpack.c.bf16 %v1078, %v1075
      %v1164 = vpack.c.bf16 %v1086, %v1083
      %v1165 = vpack.c.bf16 %v1094, %v1091
      %v1166 = vpack.c.bf16 %v1102, %v1099
      %v1167 = vpack.c.bf16 %v1110, %v1107
      %v1168 = vpack.c.bf16 %v1118, %v1115
      %vm1169 = vcmask 261120
      %v1171 = vsel %vm1169, %v1121, 0
      %v1174 = vsel %vm1169, %v1122, 0
      %v1177 = vsel %vm1169, %v1123, 0
      %v1180 = vsel %vm1169, %v1124, 0
      %v1183 = vsel %vm1169, %v1125, 0
      %v1186 = vsel %vm1169, %v1126, 0
      %v1189 = vsel %vm1169, %v1127, 0
      %v1192 = vsel %vm1169, %v1128, 0
      %v1195 = vsel %vm1169, %v1129, 0
      %v1198 = vsel %vm1169, %v1130, 0
      %v1201 = vsel %vm1169, %v1131, 0
      %v1204 = vsel %vm1169, %v1132, 0
      %v1207 = vsel %vm1169, %v1133, 0
      %v1210 = vsel %vm1169, %v1134, 0
      %v1213 = vsel %vm1169, %v1135, 0
      %v1216 = vsel %vm1169, %v1136, 0
      %v1219 = vsel %vm1169, %v1137, 0
      %v1222 = vsel %vm1169, %v1138, 0
      %v1225 = vsel %vm1169, %v1139, 0
      %v1228 = vsel %vm1169, %v1140, 0
      %v1231 = vsel %vm1169, %v1141, 0
      %v1234 = vsel %vm1169, %v1142, 0
      %v1237 = vsel %vm1169, %v1143, 0
      %v1240 = vsel %vm1169, %v1144, 0
      %v1243 = vsel %vm1169, %v1145, 0
      %v1246 = vsel %vm1169, %v1146, 0
      %v1249 = vsel %vm1169, %v1147, 0
      %v1252 = vsel %vm1169, %v1148, 0
      %v1255 = vsel %vm1169, %v1149, 0
      %v1258 = vsel %vm1169, %v1150, 0
      %v1261 = vsel %vm1169, %v1151, 0
      %v1264 = vsel %vm1169, %v1152, 0
      %1266 = vmatprep.subr.bf16.mxu0 0
      %1267 = vmatpush1.bf16.xpose.msra.mxu0 %v1219
      %1268 = vmatprep.subr.bf16.mxu0 0
      %1269 = vmatpush1.bf16.xpose.msra.mxu0 %v1222
      %1270 = vmatprep.subr.bf16.mxu0 0
      %1271 = vmatpush1.bf16.xpose.msra.mxu0 %v1225
      %1272 = vmatprep.subr.bf16.mxu0 0
      %1273 = vmatpush1.bf16.xpose.msra.mxu0 %v1228
      %1274 = vmatprep.subr.bf16.mxu0 0
      %1275 = vmatpush1.bf16.xpose.msra.mxu0 %v1231
      %1276 = vmatprep.subr.bf16.mxu0 0
      %1277 = vmatpush1.bf16.xpose.msra.mxu0 %v1234
      %1278 = vmatprep.subr.bf16.mxu0 0
      %1279 = vmatpush1.bf16.xpose.msra.mxu0 %v1237
      %1280 = vmatprep.subr.bf16.mxu0 0
      %1281 = vmatpush1.bf16.xpose.msra.mxu0 %v1240
      %1282 = vmatprep.subr.bf16.mxu0 0
      %1283 = vmatpush1.bf16.xpose.msra.mxu0 %v1243
      %1284 = vmatprep.subr.bf16.mxu0 0
      %1285 = vmatpush1.bf16.xpose.msra.mxu0 %v1246
      %1286 = vmatprep.subr.bf16.mxu0 0
      %1287 = vmatpush1.bf16.xpose.msra.mxu0 %v1249
      %1288 = vmatprep.subr.bf16.mxu0 0
      %1289 = vmatpush1.bf16.xpose.msra.mxu0 %v1252
      %1290 = vmatprep.subr.bf16.mxu0 0
      %1291 = vmatpush1.bf16.xpose.msra.mxu0 %v1255
      %1292 = vmatprep.subr.bf16.mxu0 0
      %1293 = vmatpush1.bf16.xpose.msra.mxu0 %v1258
      %1294 = vmatprep.subr.bf16.mxu0 0
      %1295 = vmatpush1.bf16.xpose.msra.mxu0 %v1261
      %1296 = vmatprep.subr.bf16.mxu0 0
      %1297 = vmatpush1.bf16.xpose.msra.mxu0 %v1264
      %1298 = vmatprep.mubr.bf16.mxu0 0
      %1299 = vmatmul.mubr.bf16.gmra.mrb[0].mxu0 %v1171
      %v1300 = vpop.f32.mrb[0].mxu0
      %v1301 = vadd.f32 0.0, %v1300
      %v1302 = vpop.f32.mrb[0].mxu0
      %v1303 = vadd.f32 0.0, %v1302
      %v1304 = vpop.f32.mrb[0].mxu0
      %v1305 = vadd.f32 0.0, %v1304
      %v1306 = vpop.f32.mrb[0].mxu0
      %v1307 = vadd.f32 0.0, %v1306
      %1308 = vmatprep.mubr.bf16.mxu0 0
      %1309 = vmatmul.mubr.bf16.gmra.mrb[0].mxu0 %v1174
      %v1310 = vpop.f32.mrb[0].mxu0
      %v1311 = vadd.f32 0.0, %v1310
      %v1312 = vpop.f32.mrb[0].mxu0
      %v1313 = vadd.f32 0.0, %v1312
      %v1314 = vpop.f32.mrb[0].mxu0
      %v1315 = vadd.f32 0.0, %v1314
      %v1316 = vpop.f32.mrb[0].mxu0
      %v1317 = vadd.f32 0.0, %v1316
      %1318 = vmatprep.mubr.bf16.mxu0 0
      %1319 = vmatmul.mubr.bf16.gmra.mrb[0].mxu0 %v1177
      %v1320 = vpop.f32.mrb[0].mxu0
      %v1321 = vadd.f32 0.0, %v1320
      %v1322 = vpop.f32.mrb[0].mxu0
      %v1323 = vadd.f32 0.0, %v1322
      %v1324 = vpop.f32.mrb[0].mxu0
      %v1325 = vadd.f32 0.0, %v1324
      %v1326 = vpop.f32.mrb[0].mxu0
      %v1327 = vadd.f32 0.0, %v1326
      %1328 = vmatprep.mubr.bf16.mxu0 0
      %1329 = vmatmul.mubr.bf16.gmra.mrb[0].mxu0 %v1180
      %v1330 = vpop.f32.mrb[0].mxu0
      %v1331 = vadd.f32 0.0, %v1330
      %v1332 = vpop.f32.mrb[0].mxu0
      %v1333 = vadd.f32 0.0, %v1332
      %v1334 = vpop.f32.mrb[0].mxu0
      %v1335 = vadd.f32 0.0, %v1334
      %v1336 = vpop.f32.mrb[0].mxu0
      %v1337 = vadd.f32 0.0, %v1336
      %1338 = vmatprep.mubr.bf16.mxu0 0
      %1339 = vmatmul.mubr.bf16.gmra.mrb[0].mxu0 %v1183
      %v1340 = vpop.f32.mrb[0].mxu0
      %v1341 = vadd.f32 0.0, %v1340
      %v1342 = vpop.f32.mrb[0].mxu0
      %v1343 = vadd.f32 0.0, %v1342
      %v1344 = vpop.f32.mrb[0].mxu0
      %v1345 = vadd.f32 0.0, %v1344
      %v1346 = vpop.f32.mrb[0].mxu0
      %v1347 = vadd.f32 0.0, %v1346
      %1348 = vmatprep.mubr.bf16.mxu0 0
      %1349 = vmatmul.mubr.bf16.gmra.mrb[0].mxu0 %v1186
      %v1350 = vpop.f32.mrb[0].mxu0
      %v1351 = vadd.f32 0.0, %v1350
      %v1352 = vpop.f32.mrb[0].mxu0
      %v1353 = vadd.f32 0.0, %v1352
      %v1354 = vpop.f32.mrb[0].mxu0
      %v1355 = vadd.f32 0.0, %v1354
      %v1356 = vpop.f32.mrb[0].mxu0
      %v1357 = vadd.f32 0.0, %v1356
      %1358 = vmatprep.mubr.bf16.mxu0 0
      %1359 = vmatmul.mubr.bf16.gmra.mrb[0].mxu0 %v1189
      %v1360 = vpop.f32.mrb[0].mxu0
      %v1361 = vadd.f32 0.0, %v1360
      %v1362 = vpop.f32.mrb[0].mxu0
      %v1363 = vadd.f32 0.0, %v1362
      %v1364 = vpop.f32.mrb[0].mxu0
      %v1365 = vadd.f32 0.0, %v1364
      %v1366 = vpop.f32.mrb[0].mxu0
      %v1367 = vadd.f32 0.0, %v1366
      %1368 = vmatprep.mubr.bf16.mxu0 0
      %1369 = vmatmul.mubr.bf16.gmra.mrb[0].mxu0 %v1192
      %v1370 = vpop.f32.mrb[0].mxu0
      %v1371 = vadd.f32 0.0, %v1370
      %v1372 = vpop.f32.mrb[0].mxu0
      %v1373 = vadd.f32 0.0, %v1372
      %v1374 = vpop.f32.mrb[0].mxu0
      %v1375 = vadd.f32 0.0, %v1374
      %v1376 = vpop.f32.mrb[0].mxu0
      %v1377 = vadd.f32 0.0, %v1376
      %1378 = vmatprep.mubr.bf16.mxu0 0
      %1379 = vmatmul.mubr.bf16.gmra.mrb[0].mxu0 %v1195
      %v1380 = vpop.f32.mrb[0].mxu0
      %v1381 = vadd.f32 0.0, %v1380
      %v1382 = vpop.f32.mrb[0].mxu0
      %v1383 = vadd.f32 0.0, %v1382
      %v1384 = vpop.f32.mrb[0].mxu0
      %v1385 = vadd.f32 0.0, %v1384
      %v1386 = vpop.f32.mrb[0].mxu0
      %v1387 = vadd.f32 0.0, %v1386
      %1388 = vmatprep.mubr.bf16.mxu0 0
      %1389 = vmatmul.mubr.bf16.gmra.mrb[0].mxu0 %v1198
      %v1390 = vpop.f32.mrb[0].mxu0
      %v1391 = vadd.f32 0.0, %v1390
      %v1392 = vpop.f32.mrb[0].mxu0
      %v1393 = vadd.f32 0.0, %v1392
      %v1394 = vpop.f32.mrb[0].mxu0
      %v1395 = vadd.f32 0.0, %v1394
      %v1396 = vpop.f32.mrb[0].mxu0
      %v1397 = vadd.f32 0.0, %v1396
      %1398 = vmatprep.mubr.bf16.mxu0 0
      %1399 = vmatmul.mubr.bf16.gmra.mrb[0].mxu0 %v1201
      %v1400 = vpop.f32.mrb[0].mxu0
      %v1401 = vadd.f32 0.0, %v1400
      %v1402 = vpop.f32.mrb[0].mxu0
      %v1403 = vadd.f32 0.0, %v1402
      %v1404 = vpop.f32.mrb[0].mxu0
      %v1405 = vadd.f32 0.0, %v1404
      %v1406 = vpop.f32.mrb[0].mxu0
      %v1407 = vadd.f32 0.0, %v1406
      %1408 = vmatprep.mubr.bf16.mxu0 0
      %1409 = vmatmul.mubr.bf16.gmra.mrb[0].mxu0 %v1204
      %v1410 = vpop.f32.mrb[0].mxu0
      %v1411 = vadd.f32 0.0, %v1410
      %v1412 = vpop.f32.mrb[0].mxu0
      %v1413 = vadd.f32 0.0, %v1412
      %v1414 = vpop.f32.mrb[0].mxu0
      %v1415 = vadd.f32 0.0, %v1414
      %v1416 = vpop.f32.mrb[0].mxu0
      %v1417 = vadd.f32 0.0, %v1416
      %1418 = vmatprep.mubr.bf16.mxu0 0
      %1419 = vmatmul.mubr.bf16.gmra.mrb[0].mxu0 %v1207
      %v1420 = vpop.f32.mrb[0].mxu0
      %v1421 = vadd.f32 0.0, %v1420
      %v1422 = vpop.f32.mrb[0].mxu0
      %v1423 = vadd.f32 0.0, %v1422
      %v1424 = vpop.f32.mrb[0].mxu0
      %v1425 = vadd.f32 0.0, %v1424
      %v1426 = vpop.f32.mrb[0].mxu0
      %v1427 = vadd.f32 0.0, %v1426
      %1428 = vmatprep.mubr.bf16.mxu0 0
      %1429 = vmatmul.mubr.bf16.gmra.mrb[0].mxu0 %v1210
      %v1430 = vpop.f32.mrb[0].mxu0
      %v1431 = vadd.f32 0.0, %v1430
      %v1432 = vpop.f32.mrb[0].mxu0
      %v1433 = vadd.f32 0.0, %v1432
      %v1434 = vpop.f32.mrb[0].mxu0
      %v1435 = vadd.f32 0.0, %v1434
      %v1436 = vpop.f32.mrb[0].mxu0
      %v1437 = vadd.f32 0.0, %v1436
      %1438 = vmatprep.mubr.bf16.mxu0 0
      %1439 = vmatmul.mubr.bf16.gmra.mrb[0].mxu0 %v1213
      %v1440 = vpop.f32.mrb[0].mxu0
      %v1441 = vadd.f32 0.0, %v1440
      %v1442 = vpop.f32.mrb[0].mxu0
      %v1443 = vadd.f32 0.0, %v1442
      %v1444 = vpop.f32.mrb[0].mxu0
      %v1445 = vadd.f32 0.0, %v1444
      %v1446 = vpop.f32.mrb[0].mxu0
      %v1447 = vadd.f32 0.0, %v1446
      %1448 = vmatprep.mubr.bf16.mxu0 0
      %1449 = vmatmul.mubr.bf16.gmra.mrb[0].mxu0 %v1216
      %v1450 = vpop.f32.mrb[0].mxu0
      %v1451 = vadd.f32 0.0, %v1450
      %v1452 = vpop.f32.mrb[0].mxu0
      %v1453 = vadd.f32 0.0, %v1452
      %v1454 = vpop.f32.mrb[0].mxu0
      %v1455 = vadd.f32 0.0, %v1454
      %v1456 = vpop.f32.mrb[0].mxu0
      %v1457 = vadd.f32 0.0, %v1456
      %1458 = vdwg.mxu0
      %v1459 = vmax.f32 %v1301, %v1311
      %v1460 = vmax.f32 %v1305, %v1315
      %v1461 = vmax.f32 %v1459, %v1321
      %v1462 = vmax.f32 %v1460, %v1325
      %v1463 = vmax.f32 %v1461, %v1331
      %v1464 = vmax.f32 %v1462, %v1335
      %v1465 = vmax.f32 %v1463, %v1341
      %v1466 = vmax.f32 %v1464, %v1345
      %v1467 = vmax.f32 %v1465, %v1351
      %v1468 = vmax.f32 %v1466, %v1355
      %v1469 = vmax.f32 %v1467, %v1361
      %v1470 = vmax.f32 %v1468, %v1365
      %v1471 = vmax.f32 %v1469, %v1371
      %v1472 = vmax.f32 %v1470, %v1375
      %v1473 = vmax.f32 %v1471, %v1381
      %v1474 = vmax.f32 %v1472, %v1385
      %v1475 = vmax.f32 %v1473, %v1391
      %v1476 = vmax.f32 %v1474, %v1395
      %v1477 = vmax.f32 %v1475, %v1401
      %v1478 = vmax.f32 %v1476, %v1405
      %v1479 = vmax.f32 %v1477, %v1411
      %v1480 = vmax.f32 %v1478, %v1415
      %v1481 = vmax.f32 %v1479, %v1421
      %v1482 = vmax.f32 %v1480, %v1425
      %v1483 = vmax.f32 %v1481, %v1431
      %v1484 = vmax.f32 %v1482, %v1435
      %v1485 = vmax.f32 %v1483, %v1441
      %v1486 = vmax.f32 %v1484, %v1445
      %v1487 = vmax.f32 %v1485, %v1451
      %v1488 = vmax.f32 %v1486, %v1455
      %v1489 = vmax.f32 %v1487, %v1488
      %v1490 = vrot.slane %v1489, 4
      %v1491 = vmax.f32 %v1489, %v1490
      %v1492 = vrot.slane %v1491, 2
      %v1493 = vmax.f32 %v1491, %v1492
      %v1494 = vrot.slane %v1493, 1
      %v1495 = vmax.f32 %v1493, %v1494
      %v1496 = vmax.f32 %v1303, %v1313
      %v1497 = vmax.f32 %v1307, %v1317
      %v1498 = vmax.f32 %v1496, %v1323
      %v1499 = vmax.f32 %v1497, %v1327
      %v1500 = vmax.f32 %v1498, %v1333
      %v1501 = vmax.f32 %v1499, %v1337
      %v1502 = vmax.f32 %v1500, %v1343
      %v1503 = vmax.f32 %v1501, %v1347
      %v1504 = vmax.f32 %v1502, %v1353
      %v1505 = vmax.f32 %v1503, %v1357
      %v1506 = vmax.f32 %v1504, %v1363
      %v1507 = vmax.f32 %v1505, %v1367
      %v1508 = vmax.f32 %v1506, %v1373
      %v1509 = vmax.f32 %v1507, %v1377
      %v1510 = vmax.f32 %v1508, %v1383
      %v1511 = vmax.f32 %v1509, %v1387
      %v1512 = vmax.f32 %v1510, %v1393
      %v1513 = vmax.f32 %v1511, %v1397
      %v1514 = vmax.f32 %v1512, %v1403
      %v1515 = vmax.f32 %v1513, %v1407
      %v1516 = vmax.f32 %v1514, %v1413
      %v1517 = vmax.f32 %v1515, %v1417
      %v1518 = vmax.f32 %v1516, %v1423
      %v1519 = vmax.f32 %v1517, %v1427
      %v1520 = vmax.f32 %v1518, %v1433
      %v1521 = vmax.f32 %v1519, %v1437
      %v1522 = vmax.f32 %v1520, %v1443
      %v1523 = vmax.f32 %v1521, %v1447
      %v1524 = vmax.f32 %v1522, %v1453
      %v1525 = vmax.f32 %v1523, %v1457
      %v1526 = vmax.f32 %v1524, %v1525
      %v1527 = vrot.slane %v1526, 4
      %v1528 = vmax.f32 %v1526, %v1527
      %v1529 = vrot.slane %v1528, 2
      %v1530 = vmax.f32 %v1528, %v1529
      %v1531 = vrot.slane %v1530, 1
      %v1532 = vmax.f32 %v1530, %v1531
      %v1533 = vsub.f32 %v1301, %v1495
      %v1534 = vsub.f32 %v1303, %v1532
      %v1535 = vsub.f32 %v1305, %v1495
      %v1536 = vsub.f32 %v1307, %v1532
      %v1537 = vsub.f32 %v1311, %v1495
      %v1538 = vsub.f32 %v1313, %v1532
      %v1539 = vsub.f32 %v1315, %v1495
      %v1540 = vsub.f32 %v1317, %v1532
      %v1541 = vsub.f32 %v1321, %v1495
      %v1542 = vsub.f32 %v1323, %v1532
      %v1543 = vsub.f32 %v1325, %v1495
      %v1544 = vsub.f32 %v1327, %v1532
      %v1545 = vsub.f32 %v1331, %v1495
      %v1546 = vsub.f32 %v1333, %v1532
      %v1547 = vsub.f32 %v1335, %v1495
      %v1548 = vsub.f32 %v1337, %v1532
      %v1549 = vsub.f32 %v1341, %v1495
      %v1550 = vsub.f32 %v1343, %v1532
      %v1551 = vsub.f32 %v1345, %v1495
      %v1552 = vsub.f32 %v1347, %v1532
      %v1553 = vsub.f32 %v1351, %v1495
      %v1554 = vsub.f32 %v1353, %v1532
      %v1555 = vsub.f32 %v1355, %v1495
      %v1556 = vsub.f32 %v1357, %v1532
      %v1557 = vsub.f32 %v1361, %v1495
      %v1558 = vsub.f32 %v1363, %v1532
      %v1559 = vsub.f32 %v1365, %v1495
      %v1560 = vsub.f32 %v1367, %v1532
      %v1561 = vsub.f32 %v1371, %v1495
      %v1562 = vsub.f32 %v1373, %v1532
      %v1563 = vsub.f32 %v1375, %v1495
      %v1564 = vsub.f32 %v1377, %v1532
      %v1565 = vsub.f32 %v1381, %v1495
      %v1566 = vsub.f32 %v1383, %v1532
      %v1567 = vsub.f32 %v1385, %v1495
      %v1568 = vsub.f32 %v1387, %v1532
      %v1569 = vsub.f32 %v1391, %v1495
      %v1570 = vsub.f32 %v1393, %v1532
      %v1571 = vsub.f32 %v1395, %v1495
      %v1572 = vsub.f32 %v1397, %v1532
      %v1573 = vsub.f32 %v1401, %v1495
      %v1574 = vsub.f32 %v1403, %v1532
      %v1575 = vsub.f32 %v1405, %v1495
      %v1576 = vsub.f32 %v1407, %v1532
      %v1577 = vsub.f32 %v1411, %v1495
      %v1578 = vsub.f32 %v1413, %v1532
      %v1579 = vsub.f32 %v1415, %v1495
      %v1580 = vsub.f32 %v1417, %v1532
      %v1581 = vsub.f32 %v1421, %v1495
      %v1582 = vsub.f32 %v1423, %v1532
      %v1583 = vsub.f32 %v1425, %v1495
      %v1584 = vsub.f32 %v1427, %v1532
      %v1585 = vsub.f32 %v1431, %v1495
      %v1586 = vsub.f32 %v1433, %v1532
      %v1587 = vsub.f32 %v1435, %v1495
      %v1588 = vsub.f32 %v1437, %v1532
      %v1589 = vsub.f32 %v1441, %v1495
      %v1590 = vsub.f32 %v1443, %v1532
      %v1591 = vsub.f32 %v1445, %v1495
      %v1592 = vsub.f32 %v1447, %v1532
      %v1593 = vsub.f32 %v1451, %v1495
      %v1594 = vsub.f32 %v1453, %v1532
      %v1595 = vsub.f32 %v1455, %v1495
      %v1596 = vsub.f32 %v1457, %v1532
      %v1597 = vmul.f32 %v1533, 1.442695
      %v1598 = vpow.pop %v1597
      %v1599 = vmul.f32 %v1534, 1.442695
      %v1600 = vpow.pop %v1599
      %v1601 = vmul.f32 %v1535, 1.442695
      %v1602 = vpow.pop %v1601
      %v1603 = vmul.f32 %v1536, 1.442695
      %v1604 = vpow.pop %v1603
      %v1605 = vmul.f32 %v1537, 1.442695
      %v1606 = vpow.pop %v1605
      %v1607 = vmul.f32 %v1538, 1.442695
      %v1608 = vpow.pop %v1607
      %v1609 = vmul.f32 %v1539, 1.442695
      %v1610 = vpow.pop %v1609
      %v1611 = vmul.f32 %v1540, 1.442695
      %v1612 = vpow.pop %v1611
      %v1613 = vmul.f32 %v1541, 1.442695
      %v1614 = vpow.pop %v1613
      %v1615 = vmul.f32 %v1542, 1.442695
      %v1616 = vpow.pop %v1615
      %v1617 = vmul.f32 %v1543, 1.442695
      %v1618 = vpow.pop %v1617
      %v1619 = vmul.f32 %v1544, 1.442695
      %v1620 = vpow.pop %v1619
      %v1621 = vmul.f32 %v1545, 1.442695
      %v1622 = vpow.pop %v1621
      %v1623 = vmul.f32 %v1546, 1.442695
      %v1624 = vpow.pop %v1623
      %v1625 = vmul.f32 %v1547, 1.442695
      %v1626 = vpow.pop %v1625
      %v1627 = vmul.f32 %v1548, 1.442695
      %v1628 = vpow.pop %v1627
      %v1629 = vmul.f32 %v1549, 1.442695
      %v1630 = vpow.pop %v1629
      %v1631 = vmul.f32 %v1550, 1.442695
      %v1632 = vpow.pop %v1631
      %v1633 = vmul.f32 %v1551, 1.442695
      %v1634 = vpow.pop %v1633
      %v1635 = vmul.f32 %v1552, 1.442695
      %v1636 = vpow.pop %v1635
      %v1637 = vmul.f32 %v1553, 1.442695
      %v1638 = vpow.pop %v1637
      %v1639 = vmul.f32 %v1554, 1.442695
      %v1640 = vpow.pop %v1639
      %v1641 = vmul.f32 %v1555, 1.442695
      %v1642 = vpow.pop %v1641
      %v1643 = vmul.f32 %v1556, 1.442695
      %v1644 = vpow.pop %v1643
      %v1645 = vmul.f32 %v1557, 1.442695
      %v1646 = vpow.pop %v1645
      %v1647 = vmul.f32 %v1558, 1.442695
      %v1648 = vpow.pop %v1647
      %v1649 = vmul.f32 %v1559, 1.442695
      %v1650 = vpow.pop %v1649
      %v1651 = vmul.f32 %v1560, 1.442695
      %v1652 = vpow.pop %v1651
      %v1653 = vmul.f32 %v1561, 1.442695
      %v1654 = vpow.pop %v1653
      %v1655 = vmul.f32 %v1562, 1.442695
      %v1656 = vpow.pop %v1655
      %v1657 = vmul.f32 %v1563, 1.442695
      %v1658 = vpow.pop %v1657
      %v1659 = vmul.f32 %v1564, 1.442695
      %v1660 = vpow.pop %v1659
      %v1661 = vmul.f32 %v1565, 1.442695
      %v1662 = vpow.pop %v1661
      %v1663 = vmul.f32 %v1566, 1.442695
      %v1664 = vpow.pop %v1663
      %v1665 = vmul.f32 %v1567, 1.442695
      %v1666 = vpow.pop %v1665
      %v1667 = vmul.f32 %v1568, 1.442695
      %v1668 = vpow.pop %v1667
      %v1669 = vmul.f32 %v1569, 1.442695
      %v1670 = vpow.pop %v1669
      %v1671 = vmul.f32 %v1570, 1.442695
      %v1672 = vpow.pop %v1671
      %v1673 = vmul.f32 %v1571, 1.442695
      %v1674 = vpow.pop %v1673
      %v1675 = vmul.f32 %v1572, 1.442695
      %v1676 = vpow.pop %v1675
      %v1677 = vmul.f32 %v1573, 1.442695
      %v1678 = vpow.pop %v1677
      %v1679 = vmul.f32 %v1574, 1.442695
      %v1680 = vpow.pop %v1679
      %v1681 = vmul.f32 %v1575, 1.442695
      %v1682 = vpow.pop %v1681
      %v1683 = vmul.f32 %v1576, 1.442695
      %v1684 = vpow.pop %v1683
      %v1685 = vmul.f32 %v1577, 1.442695
      %v1686 = vpow.pop %v1685
      %v1687 = vmul.f32 %v1578, 1.442695
      %v1688 = vpow.pop %v1687
      %v1689 = vmul.f32 %v1579, 1.442695
      %v1690 = vpow.pop %v1689
      %v1691 = vmul.f32 %v1580, 1.442695
      %v1692 = vpow.pop %v1691
      %v1693 = vmul.f32 %v1581, 1.442695
      %v1694 = vpow.pop %v1693
      %v1695 = vmul.f32 %v1582, 1.442695
      %v1696 = vpow.pop %v1695
      %v1697 = vmul.f32 %v1583, 1.442695
      %v1698 = vpow.pop %v1697
      %v1699 = vmul.f32 %v1584, 1.442695
      %v1700 = vpow.pop %v1699
      %v1701 = vmul.f32 %v1585, 1.442695
      %v1702 = vpow.pop %v1701
      %v1703 = vmul.f32 %v1586, 1.442695
      %v1704 = vpow.pop %v1703
      %v1705 = vmul.f32 %v1587, 1.442695
      %v1706 = vpow.pop %v1705
      %v1707 = vmul.f32 %v1588, 1.442695
      %v1708 = vpow.pop %v1707
      %v1709 = vmul.f32 %v1589, 1.442695
      %v1710 = vpow.pop %v1709
      %v1711 = vmul.f32 %v1590, 1.442695
      %v1712 = vpow.pop %v1711
      %v1713 = vmul.f32 %v1591, 1.442695
      %v1714 = vpow.pop %v1713
      %v1715 = vmul.f32 %v1592, 1.442695
      %v1716 = vpow.pop %v1715
      %v1717 = vmul.f32 %v1593, 1.442695
      %v1718 = vpow.pop %v1717
      %v1719 = vmul.f32 %v1594, 1.442695
      %v1720 = vpow.pop %v1719
      %v1721 = vmul.f32 %v1595, 1.442695
      %v1722 = vpow.pop %v1721
      %v1723 = vmul.f32 %v1596, 1.442695
      %v1724 = vpow.pop %v1723
      %v1725 = vadd.f32 %v1598, %v1602
      %v1726 = vadd.f32 %v1725, %v1606
      %v1727 = vadd.f32 %v1726, %v1610
      %v1728 = vadd.f32 %v1727, %v1614
      %v1729 = vadd.f32 %v1728, %v1618
      %v1730 = vadd.f32 %v1729, %v1622
      %v1731 = vadd.f32 %v1730, %v1626
      %v1732 = vadd.f32 %v1731, %v1630
      %v1733 = vadd.f32 %v1732, %v1634
      %v1734 = vadd.f32 %v1733, %v1638
      %v1735 = vadd.f32 %v1734, %v1642
      %v1736 = vadd.f32 %v1735, %v1646
      %v1737 = vadd.f32 %v1736, %v1650
      %v1738 = vadd.f32 %v1737, %v1654
      %v1739 = vadd.f32 %v1738, %v1658
      %v1740 = vadd.f32 %v1739, %v1662
      %v1741 = vadd.f32 %v1740, %v1666
      %v1742 = vadd.f32 %v1741, %v1670
      %v1743 = vadd.f32 %v1742, %v1674
      %v1744 = vadd.f32 %v1743, %v1678
      %v1745 = vadd.f32 %v1744, %v1682
      %v1746 = vadd.f32 %v1745, %v1686
      %v1747 = vadd.f32 %v1746, %v1690
      %v1748 = vadd.f32 %v1747, %v1694
      %v1749 = vadd.f32 %v1748, %v1698
      %v1750 = vadd.f32 %v1749, %v1702
      %v1751 = vadd.f32 %v1750, %v1706
      %v1752 = vadd.f32 %v1751, %v1710
      %v1753 = vadd.f32 %v1752, %v1714
      %v1754 = vadd.f32 %v1753, %v1718
      %v1755 = vadd.f32 %v1754, %v1722
      %v1756 = vrot.slane %v1755, 4
      %v1757 = vadd.f32 %v1755, %v1756
      %v1758 = vrot.slane %v1757, 2
      %v1759 = vadd.f32 %v1757, %v1758
      %v1760 = vrot.slane %v1759, 1
      %v1761 = vadd.f32 %v1759, %v1760
      %v1762 = vadd.f32 %v1600, %v1604
      %v1763 = vadd.f32 %v1762, %v1608
      %v1764 = vadd.f32 %v1763, %v1612
      %v1765 = vadd.f32 %v1764, %v1616
      %v1766 = vadd.f32 %v1765, %v1620
      %v1767 = vadd.f32 %v1766, %v1624
      %v1768 = vadd.f32 %v1767, %v1628
      %v1769 = vadd.f32 %v1768, %v1632
      %v1770 = vadd.f32 %v1769, %v1636
      %v1771 = vadd.f32 %v1770, %v1640
      %v1772 = vadd.f32 %v1771, %v1644
      %v1773 = vadd.f32 %v1772, %v1648
      %v1774 = vadd.f32 %v1773, %v1652
      %v1775 = vadd.f32 %v1774, %v1656
      %v1776 = vadd.f32 %v1775, %v1660
      %v1777 = vadd.f32 %v1776, %v1664
      %v1778 = vadd.f32 %v1777, %v1668
      %v1779 = vadd.f32 %v1778, %v1672
      %v1780 = vadd.f32 %v1779, %v1676
      %v1781 = vadd.f32 %v1780, %v1680
      %v1782 = vadd.f32 %v1781, %v1684
      %v1783 = vadd.f32 %v1782, %v1688
      %v1784 = vadd.f32 %v1783, %v1692
      %v1785 = vadd.f32 %v1784, %v1696
      %v1786 = vadd.f32 %v1785, %v1700
      %v1787 = vadd.f32 %v1786, %v1704
      %v1788 = vadd.f32 %v1787, %v1708
      %v1789 = vadd.f32 %v1788, %v1712
      %v1790 = vadd.f32 %v1789, %v1716
      %v1791 = vadd.f32 %v1790, %v1720
      %v1792 = vadd.f32 %v1791, %v1724
      %v1793 = vrot.slane %v1792, 4
      %v1794 = vadd.f32 %v1792, %v1793
      %v1795 = vrot.slane %v1794, 2
      %v1796 = vadd.f32 %v1794, %v1795
      %v1797 = vrot.slane %v1796, 1
      %v1798 = vadd.f32 %v1796, %v1797
      %v1799 = vrcp.pop %v1761
      %v1800 = vrcp.pop %v1798
      %v1801 = vmul.f32 %v1598, %v1799
      %v1802 = vmul.f32 %v1600, %v1800
      %v1803 = vmul.f32 %v1602, %v1799
      %v1804 = vmul.f32 %v1604, %v1800
      %v1805 = vmul.f32 %v1606, %v1799
      %v1806 = vmul.f32 %v1608, %v1800
      %v1807 = vmul.f32 %v1610, %v1799
      %v1808 = vmul.f32 %v1612, %v1800
      %v1809 = vmul.f32 %v1614, %v1799
      %v1810 = vmul.f32 %v1616, %v1800
      %v1811 = vmul.f32 %v1618, %v1799
      %v1812 = vmul.f32 %v1620, %v1800
      %v1813 = vmul.f32 %v1622, %v1799
      %v1814 = vmul.f32 %v1624, %v1800
      %v1815 = vmul.f32 %v1626, %v1799
      %v1816 = vmul.f32 %v1628, %v1800
      %v1817 = vmul.f32 %v1630, %v1799
      %v1818 = vmul.f32 %v1632, %v1800
      %v1819 = vmul.f32 %v1634, %v1799
      %v1820 = vmul.f32 %v1636, %v1800
      %v1821 = vmul.f32 %v1638, %v1799
      %v1822 = vmul.f32 %v1640, %v1800
      %v1823 = vmul.f32 %v1642, %v1799
      %v1824 = vmul.f32 %v1644, %v1800
      %v1825 = vmul.f32 %v1646, %v1799
      %v1826 = vmul.f32 %v1648, %v1800
      %v1827 = vmul.f32 %v1650, %v1799
      %v1828 = vmul.f32 %v1652, %v1800
      %v1829 = vmul.f32 %v1654, %v1799
      %v1830 = vmul.f32 %v1656, %v1800
      %v1831 = vmul.f32 %v1658, %v1799
      %v1832 = vmul.f32 %v1660, %v1800
      %v1833 = vmul.f32 %v1662, %v1799
      %v1834 = vmul.f32 %v1664, %v1800
      %v1835 = vmul.f32 %v1666, %v1799
      %v1836 = vmul.f32 %v1668, %v1800
      %v1837 = vmul.f32 %v1670, %v1799
      %v1838 = vmul.f32 %v1672, %v1800
      %v1839 = vmul.f32 %v1674, %v1799
      %v1840 = vmul.f32 %v1676, %v1800
      %v1841 = vmul.f32 %v1678, %v1799
      %v1842 = vmul.f32 %v1680, %v1800
      %v1843 = vmul.f32 %v1682, %v1799
      %v1844 = vmul.f32 %v1684, %v1800
      %v1845 = vmul.f32 %v1686, %v1799
      %v1846 = vmul.f32 %v1688, %v1800
      %v1847 = vmul.f32 %v1690, %v1799
      %v1848 = vmul.f32 %v1692, %v1800
      %v1849 = vmul.f32 %v1694, %v1799
      %v1850 = vmul.f32 %v1696, %v1800
      %v1851 = vmul.f32 %v1698, %v1799
      %v1852 = vmul.f32 %v1700, %v1800
      %v1853 = vmul.f32 %v1702, %v1799
      %v1854 = vmul.f32 %v1704, %v1800
      %v1855 = vmul.f32 %v1706, %v1799
      %v1856 = vmul.f32 %v1708, %v1800
      %v1857 = vmul.f32 %v1710, %v1799
      %v1858 = vmul.f32 %v1712, %v1800
      %v1859 = vmul.f32 %v1714, %v1799
      %v1860 = vmul.f32 %v1716, %v1800
      %v1861 = vmul.f32 %v1718, %v1799
      %v1862 = vmul.f32 %v1720, %v1800
      %v1863 = vmul.f32 %v1722, %v1799
      %v1864 = vmul.f32 %v1724, %v1800
      %v1865 = vpack.c.bf16 %v1803, %v1801
      %v1866 = vpack.c.bf16 %v1804, %v1802
      %v1867 = vpack.c.bf16 %v1807, %v1805
      %v1868 = vpack.c.bf16 %v1808, %v1806
      %v1869 = vpack.c.bf16 %v1811, %v1809
      %v1870 = vpack.c.bf16 %v1812, %v1810
      %v1871 = vpack.c.bf16 %v1815, %v1813
      %v1872 = vpack.c.bf16 %v1816, %v1814
      %v1873 = vpack.c.bf16 %v1819, %v1817
      %v1874 = vpack.c.bf16 %v1820, %v1818
      %v1875 = vpack.c.bf16 %v1823, %v1821
      %v1876 = vpack.c.bf16 %v1824, %v1822
      %v1877 = vpack.c.bf16 %v1827, %v1825
      %v1878 = vpack.c.bf16 %v1828, %v1826
      %v1879 = vpack.c.bf16 %v1831, %v1829
      %v1880 = vpack.c.bf16 %v1832, %v1830
      %v1881 = vpack.c.bf16 %v1835, %v1833
      %v1882 = vpack.c.bf16 %v1836, %v1834
      %v1883 = vpack.c.bf16 %v1839, %v1837
      %v1884 = vpack.c.bf16 %v1840, %v1838
      %v1885 = vpack.c.bf16 %v1843, %v1841
      %v1886 = vpack.c.bf16 %v1844, %v1842
      %v1887 = vpack.c.bf16 %v1847, %v1845
      %v1888 = vpack.c.bf16 %v1848, %v1846
      %v1889 = vpack.c.bf16 %v1851, %v1849
      %v1890 = vpack.c.bf16 %v1852, %v1850
      %v1891 = vpack.c.bf16 %v1855, %v1853
      %v1892 = vpack.c.bf16 %v1856, %v1854
      %v1893 = vpack.c.bf16 %v1859, %v1857
      %v1894 = vpack.c.bf16 %v1860, %v1858
      %v1895 = vpack.c.bf16 %v1863, %v1861
      %v1896 = vpack.c.bf16 %v1864, %v1862
      %1897 = vmatprep.subr.bf16.mxu0 0
      %1898 = vmatpush1.bf16.msra.mxu0 %v1153
      %1899 = vmatprep.subr.bf16.mxu0 0
      %1900 = vmatpush1.bf16.msra.mxu0 %v1154
      %1901 = vmatprep.subr.bf16.mxu0 0
      %1902 = vmatpush1.bf16.msra.mxu0 %v1155
      %1903 = vmatprep.subr.bf16.mxu0 0
      %1904 = vmatpush1.bf16.msra.mxu0 %v1156
      %1905 = vmatprep.subr.bf16.mxu0 0
      %1906 = vmatpush1.bf16.msra.mxu0 %v1157
      %1907 = vmatprep.subr.bf16.mxu0 0
      %1908 = vmatpush1.bf16.msra.mxu0 %v1158
      %1909 = vmatprep.subr.bf16.mxu0 0
      %1910 = vmatpush1.bf16.msra.mxu0 %v1159
      %1911 = vmatprep.subr.bf16.mxu0 0
      %1912 = vmatpush1.bf16.msra.mxu0 %v1160
      %1913 = vmatprep.subr.bf16.mxu0 0
      %1914 = vmatpush1.bf16.msra.mxu0 %v1161
      %1915 = vmatprep.subr.bf16.mxu0 0
      %1916 = vmatpush1.bf16.msra.mxu0 %v1162
      %1917 = vmatprep.subr.bf16.mxu0 0
      %1918 = vmatpush1.bf16.msra.mxu0 %v1163
      %1919 = vmatprep.subr.bf16.mxu0 0
      %1920 = vmatpush1.bf16.msra.mxu0 %v1164
      %1921 = vmatprep.subr.bf16.mxu0 0
      %1922 = vmatpush1.bf16.msra.mxu0 %v1165
      %1923 = vmatprep.subr.bf16.mxu0 0
      %1924 = vmatpush1.bf16.msra.mxu0 %v1166
      %1925 = vmatprep.subr.bf16.mxu0 0
      %1926 = vmatpush1.bf16.msra.mxu0 %v1167
      %1927 = vmatprep.subr.bf16.mxu0 0
      %1928 = vmatpush1.bf16.msra.mxu0 %v1168
      %1929 = vmatprep.mubr.bf16.mxu0 %v1866
      %1930 = vmatmul.mubr.bf16.gmra.mrb[0].mxu0 %v1865
      %v1931 = vpop.f32.mrb[0].mxu0
      %v1932 = vadd.f32 0.0, %v1931
      %v1933 = vpop.f32.mrb[0].mxu0
      %v1934 = vpop.f32.mrb[0].mxu0
      %v1935 = vadd.f32 0.0, %v1934
      %v1936 = vpop.f32.mrb[0].mxu0
      %1937 = vmatprep.mubr.bf16.mxu0 %v1868
      %1938 = vmatmul.mubr.bf16.gmra.mrb[0].mxu0 %v1867
      %v1939 = vpop.f32.mrb[0].mxu0
      %v1940 = vadd.f32 0.0, %v1939
      %v1941 = vpop.f32.mrb[0].mxu0
      %v1942 = vpop.f32.mrb[0].mxu0
      %v1943 = vadd.f32 0.0, %v1942
      %v1944 = vpop.f32.mrb[0].mxu0
      %1945 = vmatprep.mubr.bf16.mxu0 %v1870
      %1946 = vmatmul.mubr.bf16.gmra.mrb[0].mxu0 %v1869
      %v1947 = vpop.f32.mrb[0].mxu0
      %v1948 = vadd.f32 0.0, %v1947
      %v1949 = vpop.f32.mrb[0].mxu0
      %v1950 = vpop.f32.mrb[0].mxu0
      %v1951 = vadd.f32 0.0, %v1950
      %v1952 = vpop.f32.mrb[0].mxu0
      %1953 = vmatprep.mubr.bf16.mxu0 %v1872
      %1954 = vmatmul.mubr.bf16.gmra.mrb[0].mxu0 %v1871
      %v1955 = vpop.f32.mrb[0].mxu0
      %v1956 = vadd.f32 0.0, %v1955
      %v1957 = vpop.f32.mrb[0].mxu0
      %v1958 = vpop.f32.mrb[0].mxu0
      %v1959 = vadd.f32 0.0, %v1958
      %v1960 = vpop.f32.mrb[0].mxu0
      %1961 = vmatprep.mubr.bf16.mxu0 %v1874
      %1962 = vmatmul.mubr.bf16.gmra.mrb[0].mxu0 %v1873
      %v1963 = vpop.f32.mrb[0].mxu0
      %v1964 = vadd.f32 0.0, %v1963
      %v1965 = vpop.f32.mrb[0].mxu0
      %v1966 = vpop.f32.mrb[0].mxu0
      %v1967 = vadd.f32 0.0, %v1966
      %v1968 = vpop.f32.mrb[0].mxu0
      %1969 = vmatprep.mubr.bf16.mxu0 %v1876
      %1970 = vmatmul.mubr.bf16.gmra.mrb[0].mxu0 %v1875
      %v1971 = vpop.f32.mrb[0].mxu0
      %v1972 = vadd.f32 0.0, %v1971
      %v1973 = vpop.f32.mrb[0].mxu0
      %v1974 = vpop.f32.mrb[0].mxu0
      %v1975 = vadd.f32 0.0, %v1974
      %v1976 = vpop.f32.mrb[0].mxu0
      %1977 = vmatprep.mubr.bf16.mxu0 %v1878
      %1978 = vmatmul.mubr.bf16.gmra.mrb[0].mxu0 %v1877
      %v1979 = vpop.f32.mrb[0].mxu0
      %v1980 = vadd.f32 0.0, %v1979
      %v1981 = vpop.f32.mrb[0].mxu0
      %v1982 = vpop.f32.mrb[0].mxu0
      %v1983 = vadd.f32 0.0, %v1982
      %v1984 = vpop.f32.mrb[0].mxu0
      %1985 = vmatprep.mubr.bf16.mxu0 %v1880
      %1986 = vmatmul.mubr.bf16.gmra.mrb[0].mxu0 %v1879
      %v1987 = vpop.f32.mrb[0].mxu0
      %v1988 = vadd.f32 0.0, %v1987
      %v1989 = vpop.f32.mrb[0].mxu0
      %v1990 = vpop.f32.mrb[0].mxu0
      %v1991 = vadd.f32 0.0, %v1990
      %v1992 = vpop.f32.mrb[0].mxu0
      %1993 = vmatprep.mubr.bf16.mxu0 %v1882
      %1994 = vmatmul.mubr.bf16.gmra.mrb[0].mxu0 %v1881
      %v1995 = vpop.f32.mrb[0].mxu0
      %v1996 = vadd.f32 0.0, %v1995
      %v1997 = vpop.f32.mrb[0].mxu0
      %v1998 = vpop.f32.mrb[0].mxu0
      %v1999 = vadd.f32 0.0, %v1998
      %v2000 = vpop.f32.mrb[0].mxu0
      %2001 = vmatprep.mubr.bf16.mxu0 %v1884
      %2002 = vmatmul.mubr.bf16.gmra.mrb[0].mxu0 %v1883
      %v2003 = vpop.f32.mrb[0].mxu0
      %v2004 = vadd.f32 0.0, %v2003
      %v2005 = vpop.f32.mrb[0].mxu0
      %v2006 = vpop.f32.mrb[0].mxu0
      %v2007 = vadd.f32 0.0, %v2006
      %v2008 = vpop.f32.mrb[0].mxu0
      %2009 = vmatprep.mubr.bf16.mxu0 %v1886
      %2010 = vmatmul.mubr.bf16.gmra.mrb[0].mxu0 %v1885
      %v2011 = vpop.f32.mrb[0].mxu0
      %v2012 = vadd.f32 0.0, %v2011
      %v2013 = vpop.f32.mrb[0].mxu0
      %v2014 = vpop.f32.mrb[0].mxu0
      %v2015 = vadd.f32 0.0, %v2014
      %v2016 = vpop.f32.mrb[0].mxu0
      %2017 = vmatprep.mubr.bf16.mxu0 %v1888
      %2018 = vmatmul.mubr.bf16.gmra.mrb[0].mxu0 %v1887
      %v2019 = vpop.f32.mrb[0].mxu0
      %v2020 = vadd.f32 0.0, %v2019
      %v2021 = vpop.f32.mrb[0].mxu0
      %v2022 = vpop.f32.mrb[0].mxu0
      %v2023 = vadd.f32 0.0, %v2022
      %v2024 = vpop.f32.mrb[0].mxu0
      %2025 = vmatprep.mubr.bf16.mxu0 %v1890
      %2026 = vmatmul.mubr.bf16.gmra.mrb[0].mxu0 %v1889
      %v2027 = vpop.f32.mrb[0].mxu0
      %v2028 = vadd.f32 0.0, %v2027
      %v2029 = vpop.f32.mrb[0].mxu0
      %v2030 = vpop.f32.mrb[0].mxu0
      %v2031 = vadd.f32 0.0, %v2030
      %v2032 = vpop.f32.mrb[0].mxu0
      %2033 = vmatprep.mubr.bf16.mxu0 %v1892
      %2034 = vmatmul.mubr.bf16.gmra.mrb[0].mxu0 %v1891
      %v2035 = vpop.f32.mrb[0].mxu0
      %v2036 = vadd.f32 0.0, %v2035
      %v2037 = vpop.f32.mrb[0].mxu0
      %v2038 = vpop.f32.mrb[0].mxu0
      %v2039 = vadd.f32 0.0, %v2038
      %v2040 = vpop.f32.mrb[0].mxu0
      %2041 = vmatprep.mubr.bf16.mxu0 %v1894
      %2042 = vmatmul.mubr.bf16.gmra.mrb[0].mxu0 %v1893
      %v2043 = vpop.f32.mrb[0].mxu0
      %v2044 = vadd.f32 0.0, %v2043
      %v2045 = vpop.f32.mrb[0].mxu0
      %v2046 = vpop.f32.mrb[0].mxu0
      %v2047 = vadd.f32 0.0, %v2046
      %v2048 = vpop.f32.mrb[0].mxu0
      %2049 = vmatprep.mubr.bf16.mxu0 %v1896
      %2050 = vmatmul.mubr.bf16.gmra.mrb[0].mxu0 %v1895
      %v2051 = vpop.f32.mrb[0].mxu0
      %v2052 = vadd.f32 0.0, %v2051
      %v2053 = vpop.f32.mrb[0].mxu0
      %v2054 = vpop.f32.mrb[0].mxu0
      %v2055 = vadd.f32 0.0, %v2054
      %v2056 = vpop.f32.mrb[0].mxu0
      %2057 = vdwg.mxu0
      %v2058 = vld [vmem:[%s2] sm:$0xff]
      %v2059 = vld [vmem:[%s2 + $0x8] sm:$0xff]
      %v2060 = vld [vmem:[%s2 + $0x10] sm:$0xff]
      %v2061 = vld [vmem:[%s2 + $0x18] sm:$0xff]
      %v2062 = vpack.c.bf16 %v1935, %v1932
      %v2063 = vpack.c.bf16 %v1943, %v1940
      %v2064 = vpack.c.bf16 %v1951, %v1948
      %v2065 = vpack.c.bf16 %v1959, %v1956
      %v2066 = vpack.c.bf16 %v1967, %v1964
      %v2067 = vpack.c.bf16 %v1975, %v1972
      %v2068 = vpack.c.bf16 %v1983, %v1980
      %v2069 = vpack.c.bf16 %v1991, %v1988
      %v2070 = vpack.c.bf16 %v1999, %v1996
      %v2071 = vpack.c.bf16 %v2007, %v2004
      %v2072 = vpack.c.bf16 %v2015, %v2012
      %v2073 = vpack.c.bf16 %v2023, %v2020
      %v2074 = vpack.c.bf16 %v2031, %v2028
      %v2075 = vpack.c.bf16 %v2039, %v2036
      %v2076 = vpack.c.bf16 %v2047, %v2044
      %v2077 = vpack.c.bf16 %v2055, %v2052
      %v2078 = vld [vmem:[%s3] sm:$0xff]
      %v2079 = vld [vmem:[%s3 + $0x8] sm:$0xff]
      %v2080 = vld [vmem:[%s3 + $0x10] sm:$0xff]
      %v2081 = vld [vmem:[%s3 + $0x18] sm:$0xff]
      %2083 = vset.pattern.permute.xlu0 0
      %2084 = vperm.xlu0 %2083, %v2078
      %v2085 = vpop.permute.xlu0 %2084
      %2088 = vset.pattern.permute.xlu0 0
      %2089 = vperm.xlu0 %2088, %v2079
      %v2090 = vpop.permute.xlu0 %2089
      %2093 = vset.pattern.permute.xlu0 0
      %2094 = vperm.xlu0 %2093, %v2080
      %v2095 = vpop.permute.xlu0 %2094
      %2098 = vset.pattern.permute.xlu0 0
      %2099 = vperm.xlu0 %2098, %v2081
      %v2100 = vpop.permute.xlu0 %2099
      %v2106 = vunpack.c.l.b16 %v2058
      %v2107 = vunpack.c.h.b16 %v2058
      %v2108 = vunpack.c.l.b16 %v2059
      %v2109 = vunpack.c.h.b16 %v2059
      %v2110 = vunpack.c.l.b16 %v2060
      %v2111 = vunpack.c.h.b16 %v2060
      %v2112 = vunpack.c.l.b16 %v2061
      %v2113 = vunpack.c.h.b16 %v2061
      %v2114 = vpack.c.b16 %v2108, %v2106
      %v2115 = vpack.c.b16 %v2109, %v2107
      %v2116 = vpack.c.b16 %v2112, %v2110
      %v2117 = vpack.c.b16 %v2113, %v2111
      %2122 = vmatprep.subr.bf16.mxu0 0
      %2123 = vmatpush1.bf16.msra.mxu0 %v2062
      %2124 = vmatprep.subr.bf16.mxu0 0
      %2125 = vmatpush1.bf16.msra.mxu0 %v2063
      %2126 = vmatprep.subr.bf16.mxu0 0
      %2127 = vmatpush1.bf16.msra.mxu0 %v2064
      %2128 = vmatprep.subr.bf16.mxu0 0
      %2129 = vmatpush1.bf16.msra.mxu0 %v2065
      %2130 = vmatprep.subr.bf16.mxu0 0
      %2131 = vmatpush1.bf16.msra.mxu0 %v2066
      %2132 = vmatprep.subr.bf16.mxu0 0
      %2133 = vmatpush1.bf16.msra.mxu0 %v2067
      %2134 = vmatprep.subr.bf16.mxu0 0
      %2135 = vmatpush1.bf16.msra.mxu0 %v2068
      %2136 = vmatprep.subr.bf16.mxu0 0
      %2137 = vmatpush1.bf16.msra.mxu0 %v2069
      %2138 = vmatprep.subr.bf16.mxu0 0
      %2139 = vmatpush1.bf16.msra.mxu0 %v2070
      %2140 = vmatprep.subr.bf16.mxu0 0
      %2141 = vmatpush1.bf16.msra.mxu0 %v2071
      %2142 = vmatprep.subr.bf16.mxu0 0
      %2143 = vmatpush1.bf16.msra.mxu0 %v2072
      %2144 = vmatprep.subr.bf16.mxu0 0
      %2145 = vmatpush1.bf16.msra.mxu0 %v2073
      %2146 = vmatprep.subr.bf16.mxu0 0
      %2147 = vmatpush1.bf16.msra.mxu0 %v2074
      %2148 = vmatprep.subr.bf16.mxu0 0
      %2149 = vmatpush1.bf16.msra.mxu0 %v2075
      %2150 = vmatprep.subr.bf16.mxu0 0
      %2151 = vmatpush1.bf16.msra.mxu0 %v2076
      %2152 = vmatprep.subr.bf16.mxu0 0
      %2153 = vmatpush1.bf16.msra.mxu0 %v2077
      %2154 = vmatprep.mubr.bf16.mxu0 %v2115
      %2155 = vmatmul.mubr.bf16.gmra.mrb[0].mxu0 %v2114
      %v2156 = vpop.f32.mrb[0].mxu0
      %v2157 = vadd.f32 %v2085, %v2156
      %v2158 = vpop.f32.mrb[0].mxu0
      %v2159 = vpop.f32.mrb[0].mxu0
      %v2160 = vadd.f32 %v2090, %v2159
      %v2161 = vpop.f32.mrb[0].mxu0
      %2162 = vmatprep.mubr.bf16.mxu0 %v2117
      %2163 = vmatmul.mubr.bf16.gmra.mrb[0].mxu0 %v2116
      %v2164 = vpop.f32.mrb[0].mxu0
      %v2165 = vadd.f32 %v2095, %v2164
      %v2166 = vpop.f32.mrb[0].mxu0
      %v2167 = vpop.f32.mrb[0].mxu0
      %v2168 = vadd.f32 %v2100, %v2167
      %v2169 = vpop.f32.mrb[0].mxu0
      %2170 = vdwg.mxu0
      %2171 = vst.msk [vmem:[%s197] sm:$0xff] %vm1169, %v2157
      %2172 = vst.msk [vmem:[%s197 + $0x8] sm:$0xff] %vm1169, %v2160
      %2173 = vst.msk [vmem:[%s197 + $0x10] sm:$0xff] %vm1169, %v2165
      %2174 = vst.msk [vmem:[%s197 + $0x18] sm:$0xff] %vm1169, %v2168
      %p2175 = scmp.lt.s32.totalorder %s15, 1
      %s2176 = scalar_select %p2175, %s15, 1
      %s2177 = smul.addr %s2176, 4
      %s2178 = smul.addr %s2177, 8
      %s2179 = scalar_lea.vmem %s4, %s2178
      // Predicated region
      $region37: #{attention_forward.1} parent=35 // pred_check
        %p2180 = pneg %p122
      $region38: #{attention_forward.1} parent=35 // pred_check_branch
        %2182 = sbr.rel (%p2180) target = $region40
      $region39: #{attention_forward.1} parent=35 // pred_region
        _
      $region40: #{attention_forward.1} parent=35 // pred_fallthru
        _
    $region36: #{attention_forward.1} parent=5 // pred_fallthru
      _
    %p2183 = scmp.le.s32.totalorder 2, %s10
    // Predicated region
    $region41: #{attention_forward.1} parent=5 // pred_check
      %p2184 = pneg %p2183
    $region42: #{attention_forward.1} parent=5 // pred_check_branch
      %2186 = sbr.rel (%p2184) target = $region44
    $region43: #{attention_forward.1} parent=5 // pred_region
      %s2187 = ssub.s32 %s10, 2
      // Predicated region
      $region45: #{attention_forward.1} parent=43 // pred_check
        %p2188 = pneg %p128
      $region46: #{attention_forward.1} parent=43 // pred_check_branch
        %2190 = sbr.rel (%p2188) target = $region48
      $region47: #{attention_forward.1} parent=43 // pred_region
        %p2191 = scmp.lt.s32.totalorder %s16, 1
        %s2192 = scalar_select %p2191, %s16, 1
        %s2193 = smul.addr %s2192, 4
        %s2194 = smul.addr %s2193, 8
        %s2195 = scalar_lea.vmem %s4, %s2194
      $region48: #{attention_forward.1} parent=43 // pred_fallthru
        _
    $region44: #{attention_forward.1} parent=5 // pred_fallthru
      _
  $region6: #{attention_forward.1} parent=0 // loop_footer
    %s14 = sadd.s32 1, %s10
  $region7: #{attention_forward.1} parent=0 // loop_footer_branch
    %9 = sbr.rel target = $region3
  $region8: #{attention_forward.1} parent=0 // loop_exit
    _

</llo_original>
